<compile_context>
chip_gen: v6e
topology: v6e:2x2x1
jax: 0.10.0
libtpu: 0.0.40
codegen_flags: <defaults>
</compile_context>

<pallas_src>
import functools

import jax
import jax.numpy as jnp
from jax import lax
from jax.experimental import pallas as pl
from jax.experimental.pallas import tpu as pltpu


def _conv_relu_stats_kernel(lhs_ref, rhs_ref, bias_ref,
                            act_ref, s1_ref, s2_ref, *, p_total, tp):
    """Pass 1, one (sample n, spatial tile p) step.

    lhs_ref : (1, K, tp)       bf16 im2col patches for this spatial tile
    rhs_ref : (Cout, K)        bf16 conv weights with the skip path folded in
    bias_ref: (Cout, 1)        f32 combined bias
    act_ref : (1, Cout, tp)    pre-norm ReLU activations (final layout)
    s1_ref  : (1, 1, Cout, 1)  per-tile sum            (f32 partial stats)
    s2_ref  : (1, 1, Cout, 1)  per-tile sum of squares (f32 partial stats)
    """
    # conv3d + residual as ONE MXU matmul, f32 accumulation.
    t = jnp.dot(rhs_ref[...], lhs_ref[0], preferred_element_type=jnp.float32)
    a = jnp.maximum(t + bias_ref[...], 0.0)                    # bias + ReLU (VPU)

    # Mask spatial padding (only the last tile can be ragged) so it does not
    # pollute the InstanceNorm statistics.
    pos = pl.program_id(1) * tp + lax.broadcasted_iota(jnp.int32, a.shape, 1)
    a = jnp.where(pos < p_total, a, 0.0)

    act_ref[0] = a.astype(act_ref.dtype)                       # lane-dense store
    s1_ref[0, 0] = jnp.sum(a, axis=1, keepdims=True)
    s2_ref[0, 0] = jnp.sum(a * a, axis=1, keepdims=True)


def _instance_norm_kernel(act_ref, mean_ref, inv_ref, out_ref):
    """Pass 2: normalize one (Cout, tp) tile in place (act aliased to out)."""
    a = act_ref[0].astype(jnp.float32)
    out_ref[0] = ((a - mean_ref[0]) * inv_ref[0]).astype(out_ref.dtype)


def res_conv3d_block(x, w_conv, b_conv, w_res=None, b_res=None, *, eps=1e-5):
    """ResConv3dBlock.forward: InstanceNorm3d(ReLU(conv3d(x) + res(x)))."""
    N, Cin, D, H, W = x.shape
    Cout = w_conv.shape[0]
    k = w_conv.shape[2]
    assert w_conv.shape == (Cout, Cin, k, k, k)
    pad = k // 2
    P = D * H * W

    # ---- fold the skip path into the center tap of the k^3 weights ----------
    if w_res is None:
        if Cin != Cout:
            raise ValueError("w_res is required when Cin != Cout")
        w_skip = jnp.eye(Cout, dtype=jnp.float32)
        b_skip = jnp.zeros((Cout,), jnp.float32)
    else:
        w_skip = w_res.reshape(Cout, Cin).astype(jnp.float32)
        b_skip = b_res.astype(jnp.float32)
    w_eff = w_conv.astype(jnp.float32).at[:, :, pad, pad, pad].add(w_skip)
    rhs = w_eff.reshape(Cout, Cin * k ** 3).astype(jnp.bfloat16)
    bias = (b_conv.astype(jnp.float32) + b_skip).reshape(Cout, 1)

    # ---- lane-dense spatial tiling (ragged P handled by pad + mask) ---------
    p128 = -(-P // 128) * 128
    tp = min(2048, p128)                       # big tiles: fewer grid steps
    if N * (-(-P // tp)) < 2 and tp % 256 == 0:
        tp //= 2                               # >=2 parallel steps for 2-TC chips
    assert tp % 128 == 0
    nt = -(-P // tp)
    pp = nt * tp

    # ---- im2col in bf16 (skip fold => no extra residual columns) ------------
    # TODO(synk): move patch construction in-kernel (halo DMA) to cut input
    #             HBM traffic by ~k^3x; bf16 patches already halve it.
    xb = x.astype(jnp.bfloat16)
    x_sp = jnp.pad(xb, ((0, 0), (0, 0), (pad, pad), (pad, pad), (pad, pad)))
    cols = []
    for kd in range(k):
        for kh in range(k):
            for kw in range(k):
                cols.append(x_sp[:, :, kd:kd + D, kh:kh + H, kw:kw + W])
    lhs = jnp.stack(cols, axis=2).reshape(N, Cin * k ** 3, P)

    K = Cin * k ** 3
    k_pad = -(-K // 128) * 128
    lhs = jnp.pad(lhs, ((0, 0), (0, k_pad - K), (0, pp - P)))
    rhs = jnp.pad(rhs, ((0, 0), (0, k_pad - K)))
    K = k_pad

    # ---- pass 1: conv + bias + ReLU + streaming per-tile stats --------------
    kernel1 = functools.partial(_conv_relu_stats_kernel, p_total=P, tp=tp)
    act, s1, s2 = pl.pallas_call(
        kernel1,
        out_shape=(
            jax.ShapeDtypeStruct((N, Cout, pp), x.dtype),
            jax.ShapeDtypeStruct((N, nt, Cout, 1), jnp.float32),
            jax.ShapeDtypeStruct((N, nt, Cout, 1), jnp.float32),
        ),
        grid=(N, nt),
        in_specs=[
            pl.BlockSpec((1, K, tp), lambda n, p: (n, 0, p)),
            pl.BlockSpec((Cout, K), lambda n, p: (0, 0)),
            pl.BlockSpec((Cout, 1), lambda n, p: (0, 0)),
        ],
        out_specs=(
            pl.BlockSpec((1, Cout, tp), lambda n, p: (n, 0, p)),
            pl.BlockSpec((1, 1, Cout, 1), lambda n, p: (n, p, 0, 0)),
            pl.BlockSpec((1, 1, Cout, 1), lambda n, p: (n, p, 0, 0)),
        ),
        compiler_params=pltpu.CompilerParams(
            dimension_semantics=("parallel", "parallel")),
    )(lhs, rhs, bias)

    # ---- tiny cross-tile stats reduction (O(N*nt*Cout) scalars, XLA) --------
    mean = jnp.sum(s1, axis=1)[..., 0] / P                       # (N, Cout)
    var = jnp.maximum(jnp.sum(s2, axis=1)[..., 0] / P - mean * mean, 0.0)
    inv = lax.rsqrt(var + eps)
    mean3 = mean[:, :, None]
    inv3 = inv[:, :, None]

    # ---- pass 2: in-place normalization (act aliased to output) -------------
    out = pl.pallas_call(
        _instance_norm_kernel,
        out_shape=jax.ShapeDtypeStruct((N, Cout, pp), x.dtype),
        grid=(N, nt),
        in_specs=[
            pl.BlockSpec((1, Cout, tp), lambda n, p: (n, 0, p)),
            pl.BlockSpec((1, Cout, 1), lambda n, p: (n, 0, 0)),
            pl.BlockSpec((1, Cout, 1), lambda n, p: (n, 0, 0)),
        ],
        out_specs=pl.BlockSpec((1, Cout, tp), lambda n, p: (n, 0, p)),
        input_output_aliases={0: 0},
        compiler_params=pltpu.CompilerParams(
            dimension_semantics=("parallel", "parallel")),
    )(act, mean3, inv3)

    # Output is already channels-first lane-dense; just drop the pad and reshape.
    return out[:, :, :P].reshape(N, Cout, D, H, W)


def _res_conv3d_ref(x, w_conv, b_conv, w_res, b_res, eps=1e-5,
                    operand_dtype=None):
    """Pure-JAX reference of the PyTorch module (f32 math).

    operand_dtype=jnp.bfloat16 rounds the matmul operands like the kernel does,
    for a tight apples-to-apples comparison.
    """
    f32 = jnp.float32
    if operand_dtype is not None:
        x = x.astype(operand_dtype).astype(f32)
        w_conv = w_conv.astype(operand_dtype).astype(f32)
        if w_res is not None:
            w_res = w_res.astype(operand_dtype).astype(f32)
    pad = w_conv.shape[2] // 2
    dn = ("NCDHW", "OIDHW", "NCDHW")
    y = lax.conv_general_dilated(
        x, w_conv, window_strides=(1, 1, 1), padding=[(pad, pad)] * 3,
        dimension_numbers=dn, precision=lax.Precision.HIGHEST)
    y = y + b_conv.reshape(1, -1, 1, 1, 1)
    if w_res is None:
        res = x
    else:
        res = lax.conv_general_dilated(
            x, w_res, window_strides=(1, 1, 1), padding=[(0, 0)] * 3,
            dimension_numbers=dn, precision=lax.Precision.HIGHEST)
        res = res + b_res.reshape(1, -1, 1, 1, 1)
    a = jnp.maximum(y + res, 0.0)
    mean = a.mean(axis=(2, 3, 4), keepdims=True)
    var = jnp.square(a - mean).mean(axis=(2, 3, 4), keepdims=True)
    return (a - mean) * lax.rsqrt(var + eps)


def _check(out, x, w, b, wr, br):
    # Tight check vs a bf16-operand reference, loose check vs the pure-f32
    # module reference (difference is bf16 rounding of the MXU operands).
    ref_bf = _res_conv3d_ref(x, w, b, wr, br, operand_dtype=jnp.bfloat16)
    ref_f32 = _res_conv3d_ref(x, w, b, wr, br)
    err_bf = float(jnp.max(jnp.abs(out - ref_bf)))
    err_f32 = float(jnp.max(jnp.abs(out - ref_f32)))
    assert err_bf < 5e-2, f"mismatch vs bf16-operand ref: {err_bf}"
    assert err_f32 < 1.5e-1, f"mismatch vs f32 ref: {err_f32}"


if __name__ == "__main__":
    key = jax.random.PRNGKey(0)
    ks = jax.random.split(key, 12)
    fwd = jax.jit(res_conv3d_block)

    # Case 1: Cin != Cout -> 1x1x1 residual-conv path.
    N, Cin, Cout, D, H, W, K3 = 2, 4, 8, 8, 16, 16, 3
    x = jax.random.normal(ks[0], (N, Cin, D, H, W), jnp.float32)
    w1 = jax.random.normal(ks[1], (Cout, Cin, K3, K3, K3), jnp.float32) / (Cin * K3 ** 3) ** 0.5
    b1 = 0.1 * jax.random.normal(ks[2], (Cout,), jnp.float32)
    wr = jax.random.normal(ks[3], (Cout, Cin, 1, 1, 1), jnp.float32) / Cin ** 0.5
    br = 0.1 * jax.random.normal(ks[4], (Cout,), jnp.float32)
    out = jax.block_until_ready(fwd(x, w1, b1, wr, br))
    assert out.shape == (N, Cout, D, H, W) and out.dtype == x.dtype
    _check(out, x, w1, b1, wr, br)

    # Case 2: Cin == Cout -> identity-skip path (folded into the center tap).
    x2 = jax.random.normal(ks[5], (N, Cout, D, H, W), jnp.float32)
    w2 = jax.random.normal(ks[6], (Cout, Cout, K3, K3, K3), jnp.float32) / (Cout * K3 ** 3) ** 0.5
    b2 = 0.1 * jax.random.normal(ks[7], (Cout,), jnp.float32)
    out2 = jax.block_until_ready(fwd(x2, w2, b2))
    _check(out2, x2, w2, b2, None, None)

    # Case 3: N == 1 with a ragged spatial size (P=720, not a multiple of 128)
    # -> exercises the pad+mask path and the tp-halving (2-TC) branch.
    D3, H3, W3 = 5, 12, 12
    x3 = jax.random.normal(ks[8], (1, Cin, D3, H3, W3), jnp.float32)
    w3 = jax.random.normal(ks[9], (Cout, Cin, K3, K3, K3), jnp.float32) / (Cin * K3 ** 3) ** 0.5
    b3 = 0.1 * jax.random.normal(ks[10], (Cout,), jnp.float32)
    wr3 = jax.random.normal(ks[11], (Cout, Cin, 1, 1, 1), jnp.float32) / Cin ** 0.5
    br3 = jnp.zeros((Cout,), jnp.float32)
    out3 = jax.block_until_ready(fwd(x3, w3, b3, wr3, br3))
    assert out3.shape == (1, Cout, D3, H3, W3)
    _check(out3, x3, w3, b3, wr3, br3)

    print("KERNEL_OK")
</pallas_src>

<mosaic_0001>
module attributes {stable_mosaic.version = 11 : i64} {
  func.func @_conv_relu_stats_kernel(%arg0: i32, %arg1: i32, %arg2: memref<1x128x2048xbf16, #tpu.memory_space<vmem>>, %arg3: memref<8x128xbf16, #tpu.memory_space<vmem>>, %arg4: memref<8x1xf32, #tpu.memory_space<vmem>>, %arg5: memref<1x8x2048xf32, #tpu.memory_space<vmem>>, %arg6: memref<1x1x8x1xf32, #tpu.memory_space<vmem>>, %arg7: memref<1x1x8x1xf32, #tpu.memory_space<vmem>>) attributes {dimension_semantics = [#tpu.dimension_semantics<parallel>, #tpu.dimension_semantics<parallel>], iteration_bounds = array<i64: 2, 1>, scalar_prefetch = 0 : i64, scratch_operands = 0 : i64, tpu.core_type = #tpu.core_type<tc>, window_params = [{transform_indices = @transform_0, window_bounds = array<i64: 1, 128, 2048>}, {pipeline_mode = #tpu.pipeline_mode<synchronous>, transform_indices = @transform_1, window_bounds = array<i64: 8, 128>}, {pipeline_mode = #tpu.pipeline_mode<synchronous>, transform_indices = @transform_2, window_bounds = array<i64: 8, 1>}, {transform_indices = @transform_3, window_bounds = array<i64: 1, 8, 2048>}, {transform_indices = @transform_4, window_bounds = array<i64: 1, 1, 8, 1>}, {transform_indices = @transform_5, window_bounds = array<i64: 1, 1, 8, 1>}]} {
    %c0 = arith.constant 0 : index
    %c0_0 = arith.constant 0 : index
    %0 = vector.load %arg3[%c0, %c0_0] : memref<8x128xbf16, #tpu.memory_space<vmem>>, vector<8x128xbf16>
    %c0_1 = arith.constant 0 : index
    %c0_2 = arith.constant 0 : index
    %c0_3 = arith.constant 0 : index
    %1 = vector.load %arg2[%c0_1, %c0_2, %c0_3] : memref<1x128x2048xbf16, #tpu.memory_space<vmem>>, vector<1x128x2048xbf16>
    %2 = vector.shape_cast %1 : vector<1x128x2048xbf16> to vector<128x2048xbf16>
    %cst = arith.constant dense<0.000000e+00> : vector<8x2048xf32>
    %3 = tpu.matmul %0, %2, %cst {dimension_numbers = #tpu.dot_dimension_numbers<[1], [0], [0], [1], [0, 0, 1, 1], [], []>} : vector<8x128xbf16>, vector<128x2048xbf16>, vector<8x2048xf32> -> vector<8x2048xf32>
    %c0_4 = arith.constant 0 : index
    %c0_5 = arith.constant 0 : index
    %4 = vector.load %arg4[%c0_4, %c0_5] : memref<8x1xf32, #tpu.memory_space<vmem>>, vector<8x1xf32>
    %5 = vector.broadcast %4 : vector<8x1xf32> to vector<8x2048xf32>
    %6 = arith.addf %3, %5 : vector<8x2048xf32>
    %cst_6 = arith.constant 0.000000e+00 : f32
    %7 = vector.broadcast %cst_6 : f32 to vector<8x2048xf32>
    %8 = arith.maximumf %6, %7 : vector<8x2048xf32>
    %c2048_i32 = arith.constant 2048 : i32
    %9 = arith.muli %arg1, %c2048_i32 : i32
    %10 = tpu.iota {dimensions = array<i32: 1>} : vector<8x2048xi32>
    %11 = vector.broadcast %9 : i32 to vector<8x2048xi32>
    %12 = arith.addi %11, %10 : vector<8x2048xi32>
    %c2048_i32_7 = arith.constant 2048 : i32
    %13 = vector.broadcast %c2048_i32_7 : i32 to vector<8x2048xi32>
    %14 = arith.cmpi slt, %12, %13 : vector<8x2048xi32>
    %cst_8 = arith.constant 0.000000e+00 : f32
    %15 = vector.broadcast %cst_8 : f32 to vector<8x2048xf32>
    %16 = arith.select %14, %8, %15 : vector<8x2048xi1>, vector<8x2048xf32>
    %c0_9 = arith.constant 0 : index
    %c0_10 = arith.constant 0 : index
    %c0_11 = arith.constant 0 : index
    %17 = vector.load %arg5[%c0_9, %c0_10, %c0_11] : memref<1x8x2048xf32, #tpu.memory_space<vmem>>, vector<1x8x2048xf32>
    %18 = vector.shape_cast %17 : vector<1x8x2048xf32> to vector<8x2048xf32>
    %19 = vector.shape_cast %16 : vector<8x2048xf32> to vector<1x8x2048xf32>
    tpu.vector_store %arg5[%c0_9, %c0_10, %c0_11], %19 {strides = array<i32>} : memref<1x8x2048xf32, #tpu.memory_space<vmem>>, vector<1x8x2048xf32>,
    %cst_12 = arith.constant dense<0.000000e+00> : vector<8xf32>
    %20 = vector.multi_reduction <add>, %16, %cst_12 [1] : vector<8x2048xf32> to vector<8xf32>
    %21 = vector.shape_cast %20 : vector<8xf32> to vector<8x1xf32>
    %c0_13 = arith.constant 0 : index
    %c0_14 = arith.constant 0 : index
    %c0_15 = arith.constant 0 : index
    %c0_16 = arith.constant 0 : index
    %22 = vector.load %arg6[%c0_13, %c0_14, %c0_15, %c0_16] : memref<1x1x8x1xf32, #tpu.memory_space<vmem>>, vector<1x1x8x1xf32>
    %23 = vector.shape_cast %22 : vector<1x1x8x1xf32> to vector<8x1xf32>
    %24 = vector.shape_cast %21 : vector<8x1xf32> to vector<1x1x8x1xf32>
    tpu.vector_store %arg6[%c0_13, %c0_14, %c0_15, %c0_16], %24 {strides = array<i32>} : memref<1x1x8x1xf32, #tpu.memory_space<vmem>>, vector<1x1x8x1xf32>,
    %25 = arith.mulf %16, %16 : vector<8x2048xf32>
    %cst_17 = arith.constant dense<0.000000e+00> : vector<8xf32>
    %26 = vector.multi_reduction <add>, %25, %cst_17 [1] : vector<8x2048xf32> to vector<8xf32>
    %27 = vector.shape_cast %26 : vector<8xf32> to vector<8x1xf32>
    %c0_18 = arith.constant 0 : index
    %c0_19 = arith.constant 0 : index
    %c0_20 = arith.constant 0 : index
    %c0_21 = arith.constant 0 : index
    %28 = vector.load %arg7[%c0_18, %c0_19, %c0_20, %c0_21] : memref<1x1x8x1xf32, #tpu.memory_space<vmem>>, vector<1x1x8x1xf32>
    %29 = vector.shape_cast %28 : vector<1x1x8x1xf32> to vector<8x1xf32>
    %30 = vector.shape_cast %27 : vector<8x1xf32> to vector<1x1x8x1xf32>
    tpu.vector_store %arg7[%c0_18, %c0_19, %c0_20, %c0_21], %30 {strides = array<i32>} : memref<1x1x8x1xf32, #tpu.memory_space<vmem>>, vector<1x1x8x1xf32>,
    return
  }
  func.func @transform_0(%arg0: i32, %arg1: i32) -> (i32, i32, i32) {
    %c0_i32 = arith.constant 0 : i32
    %c0_i32_0 = arith.constant 0 : i32
    return %arg0, %c0_i32, %arg1 : i32, i32, i32
  }
  func.func @transform_1(%arg0: i32, %arg1: i32) -> (i32, i32) {
    %c0_i32 = arith.constant 0 : i32
    %c0_i32_0 = arith.constant 0 : i32
    %c0_i32_1 = arith.constant 0 : i32
    return %c0_i32, %c0_i32_0 : i32, i32
  }
  func.func @transform_2(%arg0: i32, %arg1: i32) -> (i32, i32) {
    %c0_i32 = arith.constant 0 : i32
    %c0_i32_0 = arith.constant 0 : i32
    %c0_i32_1 = arith.constant 0 : i32
    return %c0_i32, %c0_i32_0 : i32, i32
  }
  func.func @transform_3(%arg0: i32, %arg1: i32) -> (i32, i32, i32) {
    %c0_i32 = arith.constant 0 : i32
    %c0_i32_0 = arith.constant 0 : i32
    return %arg0, %c0_i32, %arg1 : i32, i32, i32
  }
  func.func @transform_4(%arg0: i32, %arg1: i32) -> (i32, i32, i32, i32) {
    %c0_i32 = arith.constant 0 : i32
    %c0_i32_0 = arith.constant 0 : i32
    %c0_i32_1 = arith.constant 0 : i32
    return %arg0, %arg1, %c0_i32, %c0_i32_0 : i32, i32, i32, i32
  }
  func.func @transform_5(%arg0: i32, %arg1: i32) -> (i32, i32, i32, i32) {
    %c0_i32 = arith.constant 0 : i32
    %c0_i32_0 = arith.constant 0 : i32
    %c0_i32_1 = arith.constant 0 : i32
    return %arg0, %arg1, %c0_i32, %c0_i32_0 : i32, i32, i32, i32
  }
}

module attributes {stable_mosaic.version = 11 : i64} {
  func.func @_instance_norm_kernel(%arg0: i32, %arg1: i32, %arg2: memref<1x8x2048xf32, #tpu.memory_space<vmem>>, %arg3: memref<1x8x1xf32, #tpu.memory_space<vmem>>, %arg4: memref<1x8x1xf32, #tpu.memory_space<vmem>>, %arg5: memref<1x8x2048xf32, #tpu.memory_space<vmem>>) attributes {dimension_semantics = [#tpu.dimension_semantics<parallel>, #tpu.dimension_semantics<parallel>], iteration_bounds = array<i64: 2, 1>, scalar_prefetch = 0 : i64, scratch_operands = 0 : i64, tpu.core_type = #tpu.core_type<tc>, window_params = [{transform_indices = @transform_0, window_bounds = array<i64: 1, 8, 2048>}, {transform_indices = @transform_1, window_bounds = array<i64: 1, 8, 1>}, {transform_indices = @transform_2, window_bounds = array<i64: 1, 8, 1>}, {transform_indices = @transform_3, window_bounds = array<i64: 1, 8, 2048>}]} {
    %c0 = arith.constant 0 : index
    %c0_0 = arith.constant 0 : index
    %c0_1 = arith.constant 0 : index
    %0 = vector.load %arg2[%c0, %c0_0, %c0_1] : memref<1x8x2048xf32, #tpu.memory_space<vmem>>, vector<1x8x2048xf32>
    %1 = vector.shape_cast %0 : vector<1x8x2048xf32> to vector<8x2048xf32>
    %c0_2 = arith.constant 0 : index
    %c0_3 = arith.constant 0 : index
    %c0_4 = arith.constant 0 : index
    %2 = vector.load %arg3[%c0_2, %c0_3, %c0_4] : memref<1x8x1xf32, #tpu.memory_space<vmem>>, vector<1x8x1xf32>
    %3 = vector.shape_cast %2 : vector<1x8x1xf32> to vector<8x1xf32>
    %4 = vector.broadcast %3 : vector<8x1xf32> to vector<8x2048xf32>
    %5 = arith.subf %1, %4 : vector<8x2048xf32>
    %c0_5 = arith.constant 0 : index
    %c0_6 = arith.constant 0 : index
    %c0_7 = arith.constant 0 : index
    %6 = vector.load %arg4[%c0_5, %c0_6, %c0_7] : memref<1x8x1xf32, #tpu.memory_space<vmem>>, vector<1x8x1xf32>
    %7 = vector.shape_cast %6 : vector<1x8x1xf32> to vector<8x1xf32>
    %8 = vector.broadcast %7 : vector<8x1xf32> to vector<8x2048xf32>
    %9 = arith.mulf %5, %8 : vector<8x2048xf32>
    %c0_8 = arith.constant 0 : index
    %c0_9 = arith.constant 0 : index
    %c0_10 = arith.constant 0 : index
    %10 = vector.load %arg5[%c0_8, %c0_9, %c0_10] : memref<1x8x2048xf32, #tpu.memory_space<vmem>>, vector<1x8x2048xf32>
    %11 = vector.shape_cast %10 : vector<1x8x2048xf32> to vector<8x2048xf32>
    %12 = vector.shape_cast %9 : vector<8x2048xf32> to vector<1x8x2048xf32>
    tpu.vector_store %arg5[%c0_8, %c0_9, %c0_10], %12 {strides = array<i32>} : memref<1x8x2048xf32, #tpu.memory_space<vmem>>, vector<1x8x2048xf32>,
    return
  }
  func.func @transform_0(%arg0: i32, %arg1: i32) -> (i32, i32, i32) {
    %c0_i32 = arith.constant 0 : i32
    %c0_i32_0 = arith.constant 0 : i32
    return %arg0, %c0_i32, %arg1 : i32, i32, i32
  }
  func.func @transform_1(%arg0: i32, %arg1: i32) -> (i32, i32, i32) {
    %c0_i32 = arith.constant 0 : i32
    %c0_i32_0 = arith.constant 0 : i32
    %c0_i32_1 = arith.constant 0 : i32
    return %arg0, %c0_i32, %c0_i32_0 : i32, i32, i32
  }
  func.func @transform_2(%arg0: i32, %arg1: i32) -> (i32, i32, i32) {
    %c0_i32 = arith.constant 0 : i32
    %c0_i32_0 = arith.constant 0 : i32
    %c0_i32_1 = arith.constant 0 : i32
    return %arg0, %c0_i32, %c0_i32_0 : i32, i32, i32
  }
  func.func @transform_3(%arg0: i32, %arg1: i32) -> (i32, i32, i32) {
    %c0_i32 = arith.constant 0 : i32
    %c0_i32_0 = arith.constant 0 : i32
    return %arg0, %c0_i32, %arg1 : i32, i32, i32
  }
}

</mosaic_0001>

<llo_original>
// kernel: res_conv3d_block.2
$region0: #{res_conv3d_block.2}
  #allocation0 [shape = 'u32[]', space=smem, size = 0x4, offset = 0x4, fixed_abs, tag = 'smem constant byte address 0x4 - core index']
  #allocation1 [shape = 'u32[144,128]{1,0:T(1,128)}', space=vmem, size = 0x12000, scoped, tag = 'internal scratch']
  %s0 = inlined_call_operand.vmem [shape: bf16[2,128,2048], index: 0, kind: input, shape index: {}]
  %s1 = inlined_call_operand.vmem [shape: bf16[8,128], index: 1, kind: input, shape index: {}]
  %s2 = inlined_call_operand.vmem [shape: f32[8,1], index: 2, kind: input, shape index: {}]
  %s3 = inlined_call_operand.vmem [shape: f32[2,8,2048], index: 3, kind: output, shape index: {0}]
  %s4 = inlined_call_operand.vmem [shape: f32[2,1,8,1], index: 4, kind: output, shape index: {1}]
  %s5 = inlined_call_operand.vmem [shape: f32[2,1,8,1], index: 5, kind: output, shape index: {2}]
  %6 = xla_tuple %s3, %s4, %s5
  %s7 = sld [smem:[#allocation0]]
  $region61: #{res_conv3d_block.2} parent=0
    _
  %s9 = ssub.s32 1, %s7
  %s10 = scalar_select 0, %s9, %s7
  loop: start=0, step=1, limit=4
  $region2: #{res_conv3d_block.2} parent=0 // loop_pre_header
    _
  $region3: #{res_conv3d_block.2} parent=0 // loop_header
    %s12 = sphi 0, %s16
    %p13 = scmp.ge.s32.totalorder %s12, 4
    %s19 = sphi 0, %s31
    %s20 = sphi 0, %s27
    %s21 = sphi 0, %s19
    %s22 = sphi 0, %s20
    %s23 = sphi 0, %s21
    %s24 = sphi 0, %s22
    %s36 = sphi 0, %s38
    %s39 = sphi 0, %s36
    %s40 = sphi 0, %s39
    %s56 = sphi 0, %s40
    %s60 = sphi 0, %s60
    %s62 = sphi 0, %s60
    %s63 = sphi 0, %s62
    %s77 = sphi 0, %s63
    %s81 = sphi 0, %s81
    %s83 = sphi 0, %s81
    %s84 = sphi 0, %s83
    %s98 = sphi 0, %s84
    %s106 = sphi 0, %s108
    %s109 = sphi 0, %s106
    %s110 = sphi 0, %s109
    %s126 = sphi 0, %s110
    %s134 = sphi 0, %s136
    %s137 = sphi 0, %s134
    %s138 = sphi 0, %s137
    %s154 = sphi 0, %s138
    %s162 = sphi 0, %s164
    %s165 = sphi 0, %s162
    %s166 = sphi 0, %s165
    %s182 = sphi 0, %s166
  $region4: #{res_conv3d_block.2} parent=0 // loop_header_branch
    %15 = sbr.rel (%p13) target = $region8
  $region5: #{res_conv3d_block.2} parent=0 // loop_body
    %s17 = ssub.s32 %s12, 1
    %s18 = ssub.s32 %s12, 2
    %s25 = sadd.s32 1, %s20
    %p26 = scmp.ge.s32.totalorder %s25, 1
    %s27 = scalar_select %p26, 0, %s25
    %s28 = sadd.s32 1, %s19
    %s29 = scalar_select %p26, %s28, %s19
    %p30 = scmp.ge.s32.totalorder %s29, 2
    %s31 = scalar_select %p30, 0, %s29
    %s32 = ssub.s32 %s19, %s31
    %s33 = ssub.s32 %s20, %s27
    %s34 = sor.u32 %s32, %s33
    %p35 = scmp.eq.s32.totalorder %s34, 0
    %s37 = sadd.s32 %s36, 1
    %s38 = scalar_select %p35, %s36, %s37
    %p41 = pneg %p35
    %p42 = scmp.eq.s32.totalorder %s12, 1
    %p43 = por %p41, %p42
    %p44 = scmp.ne.s32.totalorder %s36, %s39
    %p45 = scmp.eq.s32.totalorder %s12, 0
    %p46 = por %p44, %p45
    %p47 = scmp.ne.s32.totalorder %s36, %s39
    %p48 = scmp.eq.s32.totalorder %s17, 1
    %p49 = por %p47, %p48
    %p50 = scmp.ne.s32.totalorder %s39, %s40
    %p51 = scmp.eq.s32.totalorder %s17, 0
    %p52 = por %p50, %p51
    %p53 = scmp.ne.s32.totalorder %s39, %s40
    %p54 = scmp.eq.s32.totalorder %s18, 1
    %p55 = por %p53, %p54
    %p57 = scmp.ne.s32.totalorder %s40, %s56
    %p58 = scmp.eq.s32.totalorder %s18, 0
    %p59 = por %p57, %p58
    %s61 = sadd.s32 %s60, 1
    %p64 = scmp.eq.s32.totalorder %s12, 1
    %p65 = scmp.ne.s32.totalorder %s60, %s62
    %p66 = scmp.eq.s32.totalorder %s12, 0
    %p67 = por %p65, %p66
    %p68 = scmp.ne.s32.totalorder %s60, %s62
    %p69 = scmp.eq.s32.totalorder %s17, 1
    %p70 = por %p68, %p69
    %p71 = scmp.ne.s32.totalorder %s62, %s63
    %p72 = scmp.eq.s32.totalorder %s17, 0
    %p73 = por %p71, %p72
    %p74 = scmp.ne.s32.totalorder %s62, %s63
    %p75 = scmp.eq.s32.totalorder %s18, 1
    %p76 = por %p74, %p75
    %p78 = scmp.ne.s32.totalorder %s63, %s77
    %p79 = scmp.eq.s32.totalorder %s18, 0
    %p80 = por %p78, %p79
    %s82 = sadd.s32 %s81, 1
    %p85 = scmp.eq.s32.totalorder %s12, 1
    %p86 = scmp.ne.s32.totalorder %s81, %s83
    %p87 = scmp.eq.s32.totalorder %s12, 0
    %p88 = por %p86, %p87
    %p89 = scmp.ne.s32.totalorder %s81, %s83
    %p90 = scmp.eq.s32.totalorder %s17, 1
    %p91 = por %p89, %p90
    %p92 = scmp.ne.s32.totalorder %s83, %s84
    %p93 = scmp.eq.s32.totalorder %s17, 0
    %p94 = por %p92, %p93
    %p95 = scmp.ne.s32.totalorder %s83, %s84
    %p96 = scmp.eq.s32.totalorder %s18, 1
    %p97 = por %p95, %p96
    %p99 = scmp.ne.s32.totalorder %s84, %s98
    %p100 = scmp.eq.s32.totalorder %s18, 0
    %p101 = por %p99, %p100
    %s102 = ssub.s32 %s19, %s31
    %s103 = ssub.s32 %s20, %s27
    %s104 = sor.u32 %s102, %s103
    %p105 = scmp.eq.s32.totalorder %s104, 0
    %s107 = sadd.s32 %s106, 1
    %s108 = scalar_select %p105, %s106, %s107
    %p111 = pneg %p105
    %p112 = scmp.eq.s32.totalorder %s12, 1
    %p113 = por %p111, %p112
    %p114 = scmp.ne.s32.totalorder %s106, %s109
    %p115 = scmp.eq.s32.totalorder %s12, 0
    %p116 = por %p114, %p115
    %p117 = scmp.ne.s32.totalorder %s106, %s109
    %p118 = scmp.eq.s32.totalorder %s17, 1
    %p119 = por %p117, %p118
    %p120 = scmp.ne.s32.totalorder %s109, %s110
    %p121 = scmp.eq.s32.totalorder %s17, 0
    %p122 = por %p120, %p121
    %p123 = scmp.ne.s32.totalorder %s109, %s110
    %p124 = scmp.eq.s32.totalorder %s18, 1
    %p125 = por %p123, %p124
    %p127 = scmp.ne.s32.totalorder %s110, %s126
    %p128 = scmp.eq.s32.totalorder %s18, 0
    %p129 = por %p127, %p128
    %s130 = ssub.s32 %s19, %s31
    %s131 = ssub.s32 %s20, %s27
    %s132 = sor.u32 %s130, %s131
    %p133 = scmp.eq.s32.totalorder %s132, 0
    %s135 = sadd.s32 %s134, 1
    %s136 = scalar_select %p133, %s134, %s135
    %p139 = pneg %p133
    %p140 = scmp.eq.s32.totalorder %s12, 1
    %p141 = por %p139, %p140
    %p142 = scmp.ne.s32.totalorder %s134, %s137
    %p143 = scmp.eq.s32.totalorder %s12, 0
    %p144 = por %p142, %p143
    %p145 = scmp.ne.s32.totalorder %s134, %s137
    %p146 = scmp.eq.s32.totalorder %s17, 1
    %p147 = por %p145, %p146
    %p148 = scmp.ne.s32.totalorder %s137, %s138
    %p149 = scmp.eq.s32.totalorder %s17, 0
    %p150 = por %p148, %p149
    %p151 = scmp.ne.s32.totalorder %s137, %s138
    %p152 = scmp.eq.s32.totalorder %s18, 1
    %p153 = por %p151, %p152
    %p155 = scmp.ne.s32.totalorder %s138, %s154
    %p156 = scmp.eq.s32.totalorder %s18, 0
    %p157 = por %p155, %p156
    %s158 = ssub.s32 %s19, %s31
    %s159 = ssub.s32 %s20, %s27
    %s160 = sor.u32 %s158, %s159
    %p161 = scmp.eq.s32.totalorder %s160, 0
    %s163 = sadd.s32 %s162, 1
    %s164 = scalar_select %p161, %s162, %s163
    %p167 = pneg %p161
    %p168 = scmp.eq.s32.totalorder %s12, 1
    %p169 = por %p167, %p168
    %p170 = scmp.ne.s32.totalorder %s162, %s165
    %p171 = scmp.eq.s32.totalorder %s12, 0
    %p172 = por %p170, %p171
    %p173 = scmp.ne.s32.totalorder %s162, %s165
    %p174 = scmp.eq.s32.totalorder %s17, 1
    %p175 = por %p173, %p174
    %p176 = scmp.ne.s32.totalorder %s165, %s166
    %p177 = scmp.eq.s32.totalorder %s17, 0
    %p178 = por %p176, %p177
    %p179 = scmp.ne.s32.totalorder %s165, %s166
    %p180 = scmp.eq.s32.totalorder %s18, 1
    %p181 = por %p179, %p180
    %p183 = scmp.ne.s32.totalorder %s166, %s182
    %p184 = scmp.eq.s32.totalorder %s18, 0
    %p185 = por %p183, %p184
    %p186 = scmp.le.s32.totalorder 1, %s12
    %p187 = scmp.lt.s32.totalorder %s12, 3
    %p188 = pnand %p186, %p187
    %p189 = pneg %p188
    // Predicated region
    $region9: #{res_conv3d_block.2} parent=5 // pred_check
      _
    $region10: #{res_conv3d_block.2} parent=5 // pred_check_branch
      %191 = sbr.rel (%p188) target = $region12
    $region11: #{res_conv3d_block.2} parent=5 // pred_region
      %s192 = ssub.s32 %s12, 1
      // Predicated region
      $region13: #{res_conv3d_block.2} parent=11 // pred_check
        %p193 = pneg %p73
      $region14: #{res_conv3d_block.2} parent=11 // pred_check_branch
        %195 = sbr.rel (%p193) target = $region16
      $region15: #{res_conv3d_block.2} parent=11 // pred_region
        _
      $region16: #{res_conv3d_block.2} parent=11 // pred_fallthru
        _
      // Predicated region
      $region17: #{res_conv3d_block.2} parent=11 // pred_check
        %p196 = pneg %p94
      $region18: #{res_conv3d_block.2} parent=11 // pred_check_branch
        %198 = sbr.rel (%p196) target = $region20
      $region19: #{res_conv3d_block.2} parent=11 // pred_region
        _
      $region20: #{res_conv3d_block.2} parent=11 // pred_fallthru
        _
    $region12: #{res_conv3d_block.2} parent=5 // pred_fallthru
      _
    %p199 = scmp.lt.s32.totalorder %s12, 2
    // Predicated region
    $region21: #{res_conv3d_block.2} parent=5 // pred_check
      %p200 = pneg %p199
    $region22: #{res_conv3d_block.2} parent=5 // pred_check_branch
      %202 = sbr.rel (%p200) target = $region24
    $region23: #{res_conv3d_block.2} parent=5 // pred_region
      // Predicated region
      $region25: #{res_conv3d_block.2} parent=23 // pred_check
        %p203 = pneg %p46
      $region26: #{res_conv3d_block.2} parent=23 // pred_check_branch
        %205 = sbr.rel (%p203) target = $region28
      $region27: #{res_conv3d_block.2} parent=23 // pred_region
        %s206 = smul.u32 16, %s20
        %p207 = scmp.lt.s32.totalorder %s19, 1
        %s208 = scalar_select %p207, %s19, 1
        %p209 = scmp.lt.s32.totalorder %s206, 15
        %s210 = scalar_select %p209, %s206, 15
        %s211 = smul.addr %s208, 256
        %s212 = sadd.s32 %s210, %s211
        %s213 = smul.addr %s212, 4
        %s214 = scalar_lea.vmem %s0, %s213
        %s215 = smul.u32 16, %s20
      $region28: #{res_conv3d_block.2} parent=23 // pred_fallthru
        _
    $region24: #{res_conv3d_block.2} parent=5 // pred_fallthru
      _
    %p216 = scmp.le.s32.totalorder 1, %s12
    %p217 = scmp.lt.s32.totalorder %s12, 3
    %p218 = pnand %p216, %p217
    %p219 = pneg %p218
    // Predicated region
    $region29: #{res_conv3d_block.2} parent=5 // pred_check
      _
    $region30: #{res_conv3d_block.2} parent=5 // pred_check_branch
      %221 = sbr.rel (%p218) target = $region32
    $region31: #{res_conv3d_block.2} parent=5 // pred_region
      %s222 = ssub.s32 %s12, 1
      %s223 = smul.u32 16, %s22
      %p224 = scmp.lt.s32.totalorder %s21, 1
      %s225 = scalar_select %p224, %s21, 1
      %p226 = scmp.lt.s32.totalorder %s223, 15
      %s227 = scalar_select %p226, %s223, 15
      %s228 = smul.addr %s225, 256
      %s229 = sadd.s32 %s227, %s228
      %s230 = smul.addr %s229, 4
      %s231 = scalar_lea.vmem %s0, %s230
      %p232 = pneg %p52
      %p233 = pneg %p49
      %p234 = pneg %p73
      %p235 = pneg %p70
      %p236 = pneg %p94
      %p237 = pneg %p91
      %p238 = pneg %p122
      %p239 = pneg %p119
      %s240 = smul.u32 16, %s22
      %p241 = scmp.lt.s32.totalorder %s21, 1
      %s242 = scalar_select %p241, %s21, 1
      %p243 = scmp.lt.s32.totalorder %s240, 15
      %s244 = scalar_select %p243, %s240, 15
      %s245 = smul.addr %s242, 16
      %s246 = sadd.s32 %s244, %s245
      %s247 = smul.addr %s246, 8
      %s248 = scalar_lea.vmem %s3, %s247
      %p249 = pneg %p150
      %p250 = pneg %p147
      %p251 = scmp.lt.s32.totalorder %s21, 1
      %s252 = scalar_select %p251, %s21, 1
      %p253 = scmp.lt.s32.totalorder %s22, 0
      %s254 = scalar_select %p253, %s22, 0
      %s255 = sadd.s32 %s254, %s252
      %s256 = smul.addr %s255, 8
      %s257 = scalar_lea.vmem %s4, %s256
      %p258 = pneg %p178
      %p259 = pneg %p175
      %p260 = scmp.lt.s32.totalorder %s21, 1
      %s261 = scalar_select %p260, %s21, 1
      %p262 = scmp.lt.s32.totalorder %s22, 0
      %s263 = scalar_select %p262, %s22, 0
      %s264 = sadd.s32 %s263, %s261
      %s265 = smul.addr %s264, 8
      %s266 = scalar_lea.vmem %s5, %s265
      %s267 = smul.u32 16, %s22
      %p268 = scmp.lt.s32.totalorder %s21, 1
      %s269 = scalar_select %p268, %s21, 1
      %p270 = scmp.lt.s32.totalorder %s267, 15
      %s271 = scalar_select %p270, %s267, 15
      %s272 = smul.addr %s269, 256
      %s273 = sadd.s32 %s271, %s272
      %s274 = smul.addr %s273, 4
      %s275 = scalar_lea.vmem %s0, %s274
      %s276 = smul.u32 16, %s22
      %s277 = smul.u32 16, %s22
      %p278 = scmp.lt.s32.totalorder %s21, 1
      %s279 = scalar_select %p278, %s21, 1
      %p280 = scmp.lt.s32.totalorder %s277, 15
      %s281 = scalar_select %p280, %s277, 15
      %s282 = smul.addr %s279, 16
      %s283 = sadd.s32 %s281, %s282
      %s284 = smul.addr %s283, 8
      %s285 = scalar_lea.vmem %s3, %s284
      %s286 = smul.u32 16, %s22
      %p287 = scmp.lt.s32.totalorder %s21, 1
      %s288 = scalar_select %p287, %s21, 1
      %p289 = scmp.lt.s32.totalorder %s22, 0
      %s290 = scalar_select %p289, %s22, 0
      %s291 = sadd.s32 %s290, %s288
      %s292 = smul.addr %s291, 8
      %s293 = scalar_lea.vmem %s4, %s292
      %p294 = scmp.lt.s32.totalorder %s21, 1
      %s295 = scalar_select %p294, %s21, 1
      %p296 = scmp.lt.s32.totalorder %s22, 0
      %s297 = scalar_select %p296, %s22, 0
      %s298 = sadd.s32 %s297, %s295
      %s299 = smul.addr %s298, 8
      %s300 = scalar_lea.vmem %s5, %s299
      %v302 = vld [vmem:[%s1] sm:$0xf]
      %v303 = vld [vmem:[%s275] sm:$0xff]
      %v304 = vld [vmem:[%s275 + $0x8] sm:$0xff]
      %v305 = vld [vmem:[%s275 + $0x10] sm:$0xff]
      %v306 = vld [vmem:[%s275 + $0x18] sm:$0xff]
      %v307 = vld [vmem:[%s275 + $0x20] sm:$0xff]
      %v308 = vld [vmem:[%s275 + $0x28] sm:$0xff]
      %v309 = vld [vmem:[%s275 + $0x30] sm:$0xff]
      %v310 = vld [vmem:[%s275 + $0x38] sm:$0xff]
      %v311 = vld [vmem:[%s275 + $0x40] sm:$0xff]
      %v312 = vld [vmem:[%s275 + $0x48] sm:$0xff]
      %v313 = vld [vmem:[%s275 + $0x50] sm:$0xff]
      %v314 = vld [vmem:[%s275 + $0x58] sm:$0xff]
      %v315 = vld [vmem:[%s275 + $0x60] sm:$0xff]
      %v316 = vld [vmem:[%s275 + $0x68] sm:$0xff]
      %v317 = vld [vmem:[%s275 + $0x70] sm:$0xff]
      %v318 = vld [vmem:[%s275 + $0x78] sm:$0xff]
      %v319 = vld [vmem:[%s275 + $0x80] sm:$0xff]
      %v320 = vld [vmem:[%s275 + $0x88] sm:$0xff]
      %v321 = vld [vmem:[%s275 + $0x90] sm:$0xff]
      %v322 = vld [vmem:[%s275 + $0x98] sm:$0xff]
      %v323 = vld [vmem:[%s275 + $0xa0] sm:$0xff]
      %v324 = vld [vmem:[%s275 + $0xa8] sm:$0xff]
      %v325 = vld [vmem:[%s275 + $0xb0] sm:$0xff]
      %v326 = vld [vmem:[%s275 + $0xb8] sm:$0xff]
      %v327 = vld [vmem:[%s275 + $0xc0] sm:$0xff]
      %v328 = vld [vmem:[%s275 + $0xc8] sm:$0xff]
      %v329 = vld [vmem:[%s275 + $0xd0] sm:$0xff]
      %v330 = vld [vmem:[%s275 + $0xd8] sm:$0xff]
      %v331 = vld [vmem:[%s275 + $0xe0] sm:$0xff]
      %v332 = vld [vmem:[%s275 + $0xe8] sm:$0xff]
      %v333 = vld [vmem:[%s275 + $0xf0] sm:$0xff]
      %v334 = vld [vmem:[%s275 + $0xf8] sm:$0xff]
      %v335 = vld [vmem:[%s275 + $0x100] sm:$0xff]
      %v336 = vld [vmem:[%s275 + $0x108] sm:$0xff]
      %v337 = vld [vmem:[%s275 + $0x110] sm:$0xff]
      %v338 = vld [vmem:[%s275 + $0x118] sm:$0xff]
      %v339 = vld [vmem:[%s275 + $0x120] sm:$0xff]
      %v340 = vld [vmem:[%s275 + $0x128] sm:$0xff]
      %v341 = vld [vmem:[%s275 + $0x130] sm:$0xff]
      %v342 = vld [vmem:[%s275 + $0x138] sm:$0xff]
      %v343 = vld [vmem:[%s275 + $0x140] sm:$0xff]
      %v344 = vld [vmem:[%s275 + $0x148] sm:$0xff]
      %v345 = vld [vmem:[%s275 + $0x150] sm:$0xff]
      %v346 = vld [vmem:[%s275 + $0x158] sm:$0xff]
      %v347 = vld [vmem:[%s275 + $0x160] sm:$0xff]
      %v348 = vld [vmem:[%s275 + $0x168] sm:$0xff]
      %v349 = vld [vmem:[%s275 + $0x170] sm:$0xff]
      %v350 = vld [vmem:[%s275 + $0x178] sm:$0xff]
      %v351 = vld [vmem:[%s275 + $0x180] sm:$0xff]
      %v352 = vld [vmem:[%s275 + $0x188] sm:$0xff]
      %v353 = vld [vmem:[%s275 + $0x190] sm:$0xff]
      %v354 = vld [vmem:[%s275 + $0x198] sm:$0xff]
      %v355 = vld [vmem:[%s275 + $0x1a0] sm:$0xff]
      %v356 = vld [vmem:[%s275 + $0x1a8] sm:$0xff]
      %v357 = vld [vmem:[%s275 + $0x1b0] sm:$0xff]
      %v358 = vld [vmem:[%s275 + $0x1b8] sm:$0xff]
      %v359 = vld [vmem:[%s275 + $0x1c0] sm:$0xff]
      %v360 = vld [vmem:[%s275 + $0x1c8] sm:$0xff]
      %v361 = vld [vmem:[%s275 + $0x1d0] sm:$0xff]
      %v362 = vld [vmem:[%s275 + $0x1d8] sm:$0xff]
      %v363 = vld [vmem:[%s275 + $0x1e0] sm:$0xff]
      %v364 = vld [vmem:[%s275 + $0x1e8] sm:$0xff]
      %v365 = vld [vmem:[%s275 + $0x1f0] sm:$0xff]
      %v366 = vld [vmem:[%s275 + $0x1f8] sm:$0xff]
      %v367 = vld [vmem:[%s275 + $0x200] sm:$0xff]
      %v368 = vld [vmem:[%s275 + $0x208] sm:$0xff]
      %v369 = vld [vmem:[%s275 + $0x210] sm:$0xff]
      %v370 = vld [vmem:[%s275 + $0x218] sm:$0xff]
      %v371 = vld [vmem:[%s275 + $0x220] sm:$0xff]
      %v372 = vld [vmem:[%s275 + $0x228] sm:$0xff]
      %v373 = vld [vmem:[%s275 + $0x230] sm:$0xff]
      %v374 = vld [vmem:[%s275 + $0x238] sm:$0xff]
      %v375 = vld [vmem:[%s275 + $0x240] sm:$0xff]
      %v376 = vld [vmem:[%s275 + $0x248] sm:$0xff]
      %v377 = vld [vmem:[%s275 + $0x250] sm:$0xff]
      %v378 = vld [vmem:[%s275 + $0x258] sm:$0xff]
      %v379 = vld [vmem:[%s275 + $0x260] sm:$0xff]
      %v380 = vld [vmem:[%s275 + $0x268] sm:$0xff]
      %v381 = vld [vmem:[%s275 + $0x270] sm:$0xff]
      %v382 = vld [vmem:[%s275 + $0x278] sm:$0xff]
      %v383 = vld [vmem:[%s275 + $0x280] sm:$0xff]
      %v384 = vld [vmem:[%s275 + $0x288] sm:$0xff]
      %v385 = vld [vmem:[%s275 + $0x290] sm:$0xff]
      %v386 = vld [vmem:[%s275 + $0x298] sm:$0xff]
      %v387 = vld [vmem:[%s275 + $0x2a0] sm:$0xff]
      %v388 = vld [vmem:[%s275 + $0x2a8] sm:$0xff]
      %v389 = vld [vmem:[%s275 + $0x2b0] sm:$0xff]
      %v390 = vld [vmem:[%s275 + $0x2b8] sm:$0xff]
      %v391 = vld [vmem:[%s275 + $0x2c0] sm:$0xff]
      %v392 = vld [vmem:[%s275 + $0x2c8] sm:$0xff]
      %v393 = vld [vmem:[%s275 + $0x2d0] sm:$0xff]
      %v394 = vld [vmem:[%s275 + $0x2d8] sm:$0xff]
      %v395 = vld [vmem:[%s275 + $0x2e0] sm:$0xff]
      %v396 = vld [vmem:[%s275 + $0x2e8] sm:$0xff]
      %v397 = vld [vmem:[%s275 + $0x2f0] sm:$0xff]
      %v398 = vld [vmem:[%s275 + $0x2f8] sm:$0xff]
      %v399 = vld [vmem:[%s275 + $0x300] sm:$0xff]
      %v400 = vld [vmem:[%s275 + $0x308] sm:$0xff]
      %v401 = vld [vmem:[%s275 + $0x310] sm:$0xff]
      %v402 = vld [vmem:[%s275 + $0x318] sm:$0xff]
      %v403 = vld [vmem:[%s275 + $0x320] sm:$0xff]
      %v404 = vld [vmem:[%s275 + $0x328] sm:$0xff]
      %v405 = vld [vmem:[%s275 + $0x330] sm:$0xff]
      %v406 = vld [vmem:[%s275 + $0x338] sm:$0xff]
      %v407 = vld [vmem:[%s275 + $0x340] sm:$0xff]
      %v408 = vld [vmem:[%s275 + $0x348] sm:$0xff]
      %v409 = vld [vmem:[%s275 + $0x350] sm:$0xff]
      %v410 = vld [vmem:[%s275 + $0x358] sm:$0xff]
      %v411 = vld [vmem:[%s275 + $0x360] sm:$0xff]
      %v412 = vld [vmem:[%s275 + $0x368] sm:$0xff]
      %v413 = vld [vmem:[%s275 + $0x370] sm:$0xff]
      %v414 = vld [vmem:[%s275 + $0x378] sm:$0xff]
      %v415 = vld [vmem:[%s275 + $0x380] sm:$0xff]
      %v416 = vld [vmem:[%s275 + $0x388] sm:$0xff]
      %v417 = vld [vmem:[%s275 + $0x390] sm:$0xff]
      %v418 = vld [vmem:[%s275 + $0x398] sm:$0xff]
      %v419 = vld [vmem:[%s275 + $0x3a0] sm:$0xff]
      %v420 = vld [vmem:[%s275 + $0x3a8] sm:$0xff]
      %v421 = vld [vmem:[%s275 + $0x3b0] sm:$0xff]
      %v422 = vld [vmem:[%s275 + $0x3b8] sm:$0xff]
      %v423 = vld [vmem:[%s275 + $0x3c0] sm:$0xff]
      %v424 = vld [vmem:[%s275 + $0x3c8] sm:$0xff]
      %v425 = vld [vmem:[%s275 + $0x3d0] sm:$0xff]
      %v426 = vld [vmem:[%s275 + $0x3d8] sm:$0xff]
      %v427 = vld [vmem:[%s275 + $0x3e0] sm:$0xff]
      %v428 = vld [vmem:[%s275 + $0x3e8] sm:$0xff]
      %v429 = vld [vmem:[%s275 + $0x3f0] sm:$0xff]
      %v430 = vld [vmem:[%s275 + $0x3f8] sm:$0xff]
      %v431 = vld [vmem:[%s2] sm:$0xff]
      %433 = vset.pattern.permute.xlu0 0
      %434 = vperm.xlu0 %433, %v431
      %v435 = vpop.permute.xlu0 %434
      %v565 = vunpack.c.l.b16 %v303
      %v566 = vunpack.c.h.b16 %v303
      %v567 = vunpack.c.l.b16 %v304
      %v568 = vunpack.c.h.b16 %v304
      %v569 = vunpack.c.l.b16 %v305
      %v570 = vunpack.c.h.b16 %v305
      %v571 = vunpack.c.l.b16 %v306
      %v572 = vunpack.c.h.b16 %v306
      %v573 = vunpack.c.l.b16 %v307
      %v574 = vunpack.c.h.b16 %v307
      %v575 = vunpack.c.l.b16 %v308
      %v576 = vunpack.c.h.b16 %v308
      %v577 = vunpack.c.l.b16 %v309
      %v578 = vunpack.c.h.b16 %v309
      %v579 = vunpack.c.l.b16 %v310
      %v580 = vunpack.c.h.b16 %v310
      %v581 = vunpack.c.l.b16 %v311
      %v582 = vunpack.c.h.b16 %v311
      %v583 = vunpack.c.l.b16 %v312
      %v584 = vunpack.c.h.b16 %v312
      %v585 = vunpack.c.l.b16 %v313
      %v586 = vunpack.c.h.b16 %v313
      %v587 = vunpack.c.l.b16 %v314
      %v588 = vunpack.c.h.b16 %v314
      %v589 = vunpack.c.l.b16 %v315
      %v590 = vunpack.c.h.b16 %v315
      %v591 = vunpack.c.l.b16 %v316
      %v592 = vunpack.c.h.b16 %v316
      %v593 = vunpack.c.l.b16 %v317
      %v594 = vunpack.c.h.b16 %v317
      %v595 = vunpack.c.l.b16 %v318
      %v596 = vunpack.c.h.b16 %v318
      %v597 = vunpack.c.l.b16 %v319
      %v598 = vunpack.c.h.b16 %v319
      %v599 = vunpack.c.l.b16 %v320
      %v600 = vunpack.c.h.b16 %v320
      %v601 = vunpack.c.l.b16 %v321
      %v602 = vunpack.c.h.b16 %v321
      %v603 = vunpack.c.l.b16 %v322
      %v604 = vunpack.c.h.b16 %v322
      %v605 = vunpack.c.l.b16 %v323
      %v606 = vunpack.c.h.b16 %v323
      %v607 = vunpack.c.l.b16 %v324
      %v608 = vunpack.c.h.b16 %v324
      %v609 = vunpack.c.l.b16 %v325
      %v610 = vunpack.c.h.b16 %v325
      %v611 = vunpack.c.l.b16 %v326
      %v612 = vunpack.c.h.b16 %v326
      %v613 = vunpack.c.l.b16 %v327
      %v614 = vunpack.c.h.b16 %v327
      %v615 = vunpack.c.l.b16 %v328
      %v616 = vunpack.c.h.b16 %v328
      %v617 = vunpack.c.l.b16 %v329
      %v618 = vunpack.c.h.b16 %v329
      %v619 = vunpack.c.l.b16 %v330
      %v620 = vunpack.c.h.b16 %v330
      %v621 = vunpack.c.l.b16 %v331
      %v622 = vunpack.c.h.b16 %v331
      %v623 = vunpack.c.l.b16 %v332
      %v624 = vunpack.c.h.b16 %v332
      %v625 = vunpack.c.l.b16 %v333
      %v626 = vunpack.c.h.b16 %v333
      %v627 = vunpack.c.l.b16 %v334
      %v628 = vunpack.c.h.b16 %v334
      %v629 = vunpack.c.l.b16 %v335
      %v630 = vunpack.c.h.b16 %v335
      %v631 = vunpack.c.l.b16 %v336
      %v632 = vunpack.c.h.b16 %v336
      %v633 = vunpack.c.l.b16 %v337
      %v634 = vunpack.c.h.b16 %v337
      %v635 = vunpack.c.l.b16 %v338
      %v636 = vunpack.c.h.b16 %v338
      %v637 = vunpack.c.l.b16 %v339
      %v638 = vunpack.c.h.b16 %v339
      %v639 = vunpack.c.l.b16 %v340
      %v640 = vunpack.c.h.b16 %v340
      %v641 = vunpack.c.l.b16 %v341
      %v642 = vunpack.c.h.b16 %v341
      %v643 = vunpack.c.l.b16 %v342
      %v644 = vunpack.c.h.b16 %v342
      %v645 = vunpack.c.l.b16 %v343
      %v646 = vunpack.c.h.b16 %v343
      %v647 = vunpack.c.l.b16 %v344
      %v648 = vunpack.c.h.b16 %v344
      %v649 = vunpack.c.l.b16 %v345
      %v650 = vunpack.c.h.b16 %v345
      %v651 = vunpack.c.l.b16 %v346
      %v652 = vunpack.c.h.b16 %v346
      %v653 = vunpack.c.l.b16 %v347
      %v654 = vunpack.c.h.b16 %v347
      %v655 = vunpack.c.l.b16 %v348
      %v656 = vunpack.c.h.b16 %v348
      %v657 = vunpack.c.l.b16 %v349
      %v658 = vunpack.c.h.b16 %v349
      %v659 = vunpack.c.l.b16 %v350
      %v660 = vunpack.c.h.b16 %v350
      %v661 = vunpack.c.l.b16 %v351
      %v662 = vunpack.c.h.b16 %v351
      %v663 = vunpack.c.l.b16 %v352
      %v664 = vunpack.c.h.b16 %v352
      %v665 = vunpack.c.l.b16 %v353
      %v666 = vunpack.c.h.b16 %v353
      %v667 = vunpack.c.l.b16 %v354
      %v668 = vunpack.c.h.b16 %v354
      %v669 = vunpack.c.l.b16 %v355
      %v670 = vunpack.c.h.b16 %v355
      %v671 = vunpack.c.l.b16 %v356
      %v672 = vunpack.c.h.b16 %v356
      %v673 = vunpack.c.l.b16 %v357
      %v674 = vunpack.c.h.b16 %v357
      %v675 = vunpack.c.l.b16 %v358
      %v676 = vunpack.c.h.b16 %v358
      %v677 = vunpack.c.l.b16 %v359
      %v678 = vunpack.c.h.b16 %v359
      %v679 = vunpack.c.l.b16 %v360
      %v680 = vunpack.c.h.b16 %v360
      %v681 = vunpack.c.l.b16 %v361
      %v682 = vunpack.c.h.b16 %v361
      %v683 = vunpack.c.l.b16 %v362
      %v684 = vunpack.c.h.b16 %v362
      %v685 = vunpack.c.l.b16 %v363
      %v686 = vunpack.c.h.b16 %v363
      %v687 = vunpack.c.l.b16 %v364
      %v688 = vunpack.c.h.b16 %v364
      %v689 = vunpack.c.l.b16 %v365
      %v690 = vunpack.c.h.b16 %v365
      %v691 = vunpack.c.l.b16 %v366
      %v692 = vunpack.c.h.b16 %v366
      %v693 = vunpack.c.l.b16 %v367
      %v694 = vunpack.c.h.b16 %v367
      %v695 = vunpack.c.l.b16 %v368
      %v696 = vunpack.c.h.b16 %v368
      %v697 = vunpack.c.l.b16 %v369
      %v698 = vunpack.c.h.b16 %v369
      %v699 = vunpack.c.l.b16 %v370
      %v700 = vunpack.c.h.b16 %v370
      %v701 = vunpack.c.l.b16 %v371
      %v702 = vunpack.c.h.b16 %v371
      %v703 = vunpack.c.l.b16 %v372
      %v704 = vunpack.c.h.b16 %v372
      %v705 = vunpack.c.l.b16 %v373
      %v706 = vunpack.c.h.b16 %v373
      %v707 = vunpack.c.l.b16 %v374
      %v708 = vunpack.c.h.b16 %v374
      %v709 = vunpack.c.l.b16 %v375
      %v710 = vunpack.c.h.b16 %v375
      %v711 = vunpack.c.l.b16 %v376
      %v712 = vunpack.c.h.b16 %v376
      %v713 = vunpack.c.l.b16 %v377
      %v714 = vunpack.c.h.b16 %v377
      %v715 = vunpack.c.l.b16 %v378
      %v716 = vunpack.c.h.b16 %v378
      %v717 = vunpack.c.l.b16 %v379
      %v718 = vunpack.c.h.b16 %v379
      %v719 = vunpack.c.l.b16 %v380
      %v720 = vunpack.c.h.b16 %v380
      %v721 = vunpack.c.l.b16 %v381
      %v722 = vunpack.c.h.b16 %v381
      %v723 = vunpack.c.l.b16 %v382
      %v724 = vunpack.c.h.b16 %v382
      %v725 = vunpack.c.l.b16 %v383
      %v726 = vunpack.c.h.b16 %v383
      %v727 = vunpack.c.l.b16 %v384
      %v728 = vunpack.c.h.b16 %v384
      %v729 = vunpack.c.l.b16 %v385
      %v730 = vunpack.c.h.b16 %v385
      %v731 = vunpack.c.l.b16 %v386
      %v732 = vunpack.c.h.b16 %v386
      %v733 = vunpack.c.l.b16 %v387
      %v734 = vunpack.c.h.b16 %v387
      %v735 = vunpack.c.l.b16 %v388
      %v736 = vunpack.c.h.b16 %v388
      %v737 = vunpack.c.l.b16 %v389
      %v738 = vunpack.c.h.b16 %v389
      %v739 = vunpack.c.l.b16 %v390
      %v740 = vunpack.c.h.b16 %v390
      %v741 = vunpack.c.l.b16 %v391
      %v742 = vunpack.c.h.b16 %v391
      %v743 = vunpack.c.l.b16 %v392
      %v744 = vunpack.c.h.b16 %v392
      %v745 = vunpack.c.l.b16 %v393
      %v746 = vunpack.c.h.b16 %v393
      %v747 = vunpack.c.l.b16 %v394
      %v748 = vunpack.c.h.b16 %v394
      %v749 = vunpack.c.l.b16 %v395
      %v750 = vunpack.c.h.b16 %v395
      %v751 = vunpack.c.l.b16 %v396
      %v752 = vunpack.c.h.b16 %v396
      %v753 = vunpack.c.l.b16 %v397
      %v754 = vunpack.c.h.b16 %v397
      %v755 = vunpack.c.l.b16 %v398
      %v756 = vunpack.c.h.b16 %v398
      %v757 = vunpack.c.l.b16 %v399
      %v758 = vunpack.c.h.b16 %v399
      %v759 = vunpack.c.l.b16 %v400
      %v760 = vunpack.c.h.b16 %v400
      %v761 = vunpack.c.l.b16 %v401
      %v762 = vunpack.c.h.b16 %v401
      %v763 = vunpack.c.l.b16 %v402
      %v764 = vunpack.c.h.b16 %v402
      %v765 = vunpack.c.l.b16 %v403
      %v766 = vunpack.c.h.b16 %v403
      %v767 = vunpack.c.l.b16 %v404
      %v768 = vunpack.c.h.b16 %v404
      %v769 = vunpack.c.l.b16 %v405
      %v770 = vunpack.c.h.b16 %v405
      %v771 = vunpack.c.l.b16 %v406
      %v772 = vunpack.c.h.b16 %v406
      %v773 = vunpack.c.l.b16 %v407
      %v774 = vunpack.c.h.b16 %v407
      %v775 = vunpack.c.l.b16 %v408
      %v776 = vunpack.c.h.b16 %v408
      %v777 = vunpack.c.l.b16 %v409
      %v778 = vunpack.c.h.b16 %v409
      %v779 = vunpack.c.l.b16 %v410
      %v780 = vunpack.c.h.b16 %v410
      %v781 = vunpack.c.l.b16 %v411
      %v782 = vunpack.c.h.b16 %v411
      %v783 = vunpack.c.l.b16 %v412
      %v784 = vunpack.c.h.b16 %v412
      %v785 = vunpack.c.l.b16 %v413
      %v786 = vunpack.c.h.b16 %v413
      %v787 = vunpack.c.l.b16 %v414
      %v788 = vunpack.c.h.b16 %v414
      %v789 = vunpack.c.l.b16 %v415
      %v790 = vunpack.c.h.b16 %v415
      %v791 = vunpack.c.l.b16 %v416
      %v792 = vunpack.c.h.b16 %v416
      %v793 = vunpack.c.l.b16 %v417
      %v794 = vunpack.c.h.b16 %v417
      %v795 = vunpack.c.l.b16 %v418
      %v796 = vunpack.c.h.b16 %v418
      %v797 = vunpack.c.l.b16 %v419
      %v798 = vunpack.c.h.b16 %v419
      %v799 = vunpack.c.l.b16 %v420
      %v800 = vunpack.c.h.b16 %v420
      %v801 = vunpack.c.l.b16 %v421
      %v802 = vunpack.c.h.b16 %v421
      %v803 = vunpack.c.l.b16 %v422
      %v804 = vunpack.c.h.b16 %v422
      %v805 = vunpack.c.l.b16 %v423
      %v806 = vunpack.c.h.b16 %v423
      %v807 = vunpack.c.l.b16 %v424
      %v808 = vunpack.c.h.b16 %v424
      %v809 = vunpack.c.l.b16 %v425
      %v810 = vunpack.c.h.b16 %v425
      %v811 = vunpack.c.l.b16 %v426
      %v812 = vunpack.c.h.b16 %v426
      %v813 = vunpack.c.l.b16 %v427
      %v814 = vunpack.c.h.b16 %v427
      %v815 = vunpack.c.l.b16 %v428
      %v816 = vunpack.c.h.b16 %v428
      %v817 = vunpack.c.l.b16 %v429
      %v818 = vunpack.c.h.b16 %v429
      %v819 = vunpack.c.l.b16 %v430
      %v820 = vunpack.c.h.b16 %v430
      %v821 = vpack.c.b16 %v581, %v565
      %v822 = vpack.c.b16 %v582, %v566
      %v823 = vpack.c.b16 %v583, %v567
      %v824 = vpack.c.b16 %v584, %v568
      %v825 = vpack.c.b16 %v585, %v569
      %v826 = vpack.c.b16 %v586, %v570
      %v827 = vpack.c.b16 %v587, %v571
      %v828 = vpack.c.b16 %v588, %v572
      %v829 = vpack.c.b16 %v589, %v573
      %v830 = vpack.c.b16 %v590, %v574
      %v831 = vpack.c.b16 %v591, %v575
      %v832 = vpack.c.b16 %v592, %v576
      %v833 = vpack.c.b16 %v593, %v577
      %v834 = vpack.c.b16 %v594, %v578
      %v835 = vpack.c.b16 %v595, %v579
      %v836 = vpack.c.b16 %v596, %v580
      %v837 = vpack.c.b16 %v613, %v597
      %v838 = vpack.c.b16 %v614, %v598
      %v839 = vpack.c.b16 %v615, %v599
      %v840 = vpack.c.b16 %v616, %v600
      %v841 = vpack.c.b16 %v617, %v601
      %v842 = vpack.c.b16 %v618, %v602
      %v843 = vpack.c.b16 %v619, %v603
      %v844 = vpack.c.b16 %v620, %v604
      %v845 = vpack.c.b16 %v621, %v605
      %v846 = vpack.c.b16 %v622, %v606
      %v847 = vpack.c.b16 %v623, %v607
      %v848 = vpack.c.b16 %v624, %v608
      %v849 = vpack.c.b16 %v625, %v609
      %v850 = vpack.c.b16 %v626, %v610
      %v851 = vpack.c.b16 %v627, %v611
      %v852 = vpack.c.b16 %v628, %v612
      %v853 = vpack.c.b16 %v645, %v629
      %v854 = vpack.c.b16 %v646, %v630
      %v855 = vpack.c.b16 %v647, %v631
      %v856 = vpack.c.b16 %v648, %v632
      %v857 = vpack.c.b16 %v649, %v633
      %v858 = vpack.c.b16 %v650, %v634
      %v859 = vpack.c.b16 %v651, %v635
      %v860 = vpack.c.b16 %v652, %v636
      %v861 = vpack.c.b16 %v653, %v637
      %v862 = vpack.c.b16 %v654, %v638
      %v863 = vpack.c.b16 %v655, %v639
      %v864 = vpack.c.b16 %v656, %v640
      %v865 = vpack.c.b16 %v657, %v641
      %v866 = vpack.c.b16 %v658, %v642
      %v867 = vpack.c.b16 %v659, %v643
      %v868 = vpack.c.b16 %v660, %v644
      %v869 = vpack.c.b16 %v677, %v661
      %v870 = vpack.c.b16 %v678, %v662
      %v871 = vpack.c.b16 %v679, %v663
      %v872 = vpack.c.b16 %v680, %v664
      %v873 = vpack.c.b16 %v681, %v665
      %v874 = vpack.c.b16 %v682, %v666
      %v875 = vpack.c.b16 %v683, %v667
      %v876 = vpack.c.b16 %v684, %v668
      %v877 = vpack.c.b16 %v685, %v669
      %v878 = vpack.c.b16 %v686, %v670
      %v879 = vpack.c.b16 %v687, %v671
      %v880 = vpack.c.b16 %v688, %v672
      %v881 = vpack.c.b16 %v689, %v673
      %v882 = vpack.c.b16 %v690, %v674
      %v883 = vpack.c.b16 %v691, %v675
      %v884 = vpack.c.b16 %v692, %v676
      %v885 = vpack.c.b16 %v709, %v693
      %v886 = vpack.c.b16 %v710, %v694
      %v887 = vpack.c.b16 %v711, %v695
      %v888 = vpack.c.b16 %v712, %v696
      %v889 = vpack.c.b16 %v713, %v697
      %v890 = vpack.c.b16 %v714, %v698
      %v891 = vpack.c.b16 %v715, %v699
      %v892 = vpack.c.b16 %v716, %v700
      %v893 = vpack.c.b16 %v717, %v701
      %v894 = vpack.c.b16 %v718, %v702
      %v895 = vpack.c.b16 %v719, %v703
      %v896 = vpack.c.b16 %v720, %v704
      %v897 = vpack.c.b16 %v721, %v705
      %v898 = vpack.c.b16 %v722, %v706
      %v899 = vpack.c.b16 %v723, %v707
      %v900 = vpack.c.b16 %v724, %v708
      %v901 = vpack.c.b16 %v741, %v725
      %v902 = vpack.c.b16 %v742, %v726
      %v903 = vpack.c.b16 %v743, %v727
      %v904 = vpack.c.b16 %v744, %v728
      %v905 = vpack.c.b16 %v745, %v729
      %v906 = vpack.c.b16 %v746, %v730
      %v907 = vpack.c.b16 %v747, %v731
      %v908 = vpack.c.b16 %v748, %v732
      %v909 = vpack.c.b16 %v749, %v733
      %v910 = vpack.c.b16 %v750, %v734
      %v911 = vpack.c.b16 %v751, %v735
      %v912 = vpack.c.b16 %v752, %v736
      %v913 = vpack.c.b16 %v753, %v737
      %v914 = vpack.c.b16 %v754, %v738
      %v915 = vpack.c.b16 %v755, %v739
      %v916 = vpack.c.b16 %v756, %v740
      %v917 = vpack.c.b16 %v773, %v757
      %v918 = vpack.c.b16 %v774, %v758
      %v919 = vpack.c.b16 %v775, %v759
      %v920 = vpack.c.b16 %v776, %v760
      %v921 = vpack.c.b16 %v777, %v761
      %v922 = vpack.c.b16 %v778, %v762
      %v923 = vpack.c.b16 %v779, %v763
      %v924 = vpack.c.b16 %v780, %v764
      %v925 = vpack.c.b16 %v781, %v765
      %v926 = vpack.c.b16 %v782, %v766
      %v927 = vpack.c.b16 %v783, %v767
      %v928 = vpack.c.b16 %v784, %v768
      %v929 = vpack.c.b16 %v785, %v769
      %v930 = vpack.c.b16 %v786, %v770
      %v931 = vpack.c.b16 %v787, %v771
      %v932 = vpack.c.b16 %v788, %v772
      %v933 = vpack.c.b16 %v805, %v789
      %v934 = vpack.c.b16 %v806, %v790
      %v935 = vpack.c.b16 %v807, %v791
      %v936 = vpack.c.b16 %v808, %v792
      %v937 = vpack.c.b16 %v809, %v793
      %v938 = vpack.c.b16 %v810, %v794
      %v939 = vpack.c.b16 %v811, %v795
      %v940 = vpack.c.b16 %v812, %v796
      %v941 = vpack.c.b16 %v813, %v797
      %v942 = vpack.c.b16 %v814, %v798
      %v943 = vpack.c.b16 %v815, %v799
      %v944 = vpack.c.b16 %v816, %v800
      %v945 = vpack.c.b16 %v817, %v801
      %v946 = vpack.c.b16 %v818, %v802
      %v947 = vpack.c.b16 %v819, %v803
      %v948 = vpack.c.b16 %v820, %v804
      %1077 = vmatprep.subr.bf16.mxu0 %v934
      %1078 = vmatpush1.bf16.msra.mxu0 %v933
      %1079 = vmatprep.subr.bf16.mxu0 %v918
      %1080 = vmatpush1.bf16.msra.mxu0 %v917
      %1081 = vmatprep.subr.bf16.mxu0 %v902
      %1082 = vmatpush1.bf16.msra.mxu0 %v901
      %1083 = vmatprep.subr.bf16.mxu0 %v886
      %1084 = vmatpush1.bf16.msra.mxu0 %v885
      %1085 = vmatprep.subr.bf16.mxu0 %v870
      %1086 = vmatpush1.bf16.msra.mxu0 %v869
      %1087 = vmatprep.subr.bf16.mxu0 %v854
      %1088 = vmatpush1.bf16.msra.mxu0 %v853
      %1089 = vmatprep.subr.bf16.mxu0 %v838
      %1090 = vmatpush1.bf16.msra.mxu0 %v837
      %1091 = vmatprep.subr.bf16.mxu0 %v822
      %1092 = vmatpush1.bf16.msra.mxu0 %v821
      %1093 = vmatprep.subr.bf16.mxu0 0
      %1094 = vmatpush2.bf16.msra.mxu0 0
      %1095 = vmatprep.subr.bf16.mxu0 0
      %1096 = vmatpush2.bf16.msra.mxu0 0
      %1097 = vmatprep.subr.bf16.mxu0 0
      %1098 = vmatpush2.bf16.msra.mxu0 0
      %1099 = vmatprep.subr.bf16.mxu0 0
      %1100 = vmatpush2.bf16.msra.mxu0 0
      %1101 = vmatprep.subr.bf16.mxu0 0
      %1102 = vmatpush2.bf16.msra.mxu0 0
      %1103 = vmatprep.subr.bf16.mxu0 0
      %1104 = vmatpush2.bf16.msra.mxu0 0
      %1105 = vmatprep.subr.bf16.mxu0 0
      %1106 = vmatpush2.bf16.msra.mxu0 0
      %1107 = vmatprep.subr.bf16.mxu0 0
      %1108 = vmatpush2.bf16.msra.mxu0 0
      %1109 = vmatprep.mubr.bf16.mxu0 0
      %1110 = vmatmul.mubr.bf16.gmra.mxu0 %v302
      %v1111 = vpop.f32.mrf.mxu0
      %v1112 = vadd.f32 %v435, %v1111
      %v1113 = vpop.f32.mrf.mxu0
      %v1114 = vadd.f32 %v435, %v1113
      %v1115 = vpop.f32.mrf.mxu0
      %v1116 = vpop.f32.mrf.mxu0
      %1117 = vdwg.mxu0
      %1118 = vmatprep.subr.bf16.mxu0 %v936
      %1119 = vmatpush1.bf16.msra.mxu0 %v935
      %1120 = vmatprep.subr.bf16.mxu0 %v920
      %1121 = vmatpush1.bf16.msra.mxu0 %v919
      %1122 = vmatprep.subr.bf16.mxu0 %v904
      %1123 = vmatpush1.bf16.msra.mxu0 %v903
      %1124 = vmatprep.subr.bf16.mxu0 %v888
      %1125 = vmatpush1.bf16.msra.mxu0 %v887
      %1126 = vmatprep.subr.bf16.mxu0 %v872
      %1127 = vmatpush1.bf16.msra.mxu0 %v871
      %1128 = vmatprep.subr.bf16.mxu0 %v856
      %1129 = vmatpush1.bf16.msra.mxu0 %v855
      %1130 = vmatprep.subr.bf16.mxu0 %v840
      %1131 = vmatpush1.bf16.msra.mxu0 %v839
      %1132 = vmatprep.subr.bf16.mxu0 %v824
      %1133 = vmatpush1.bf16.msra.mxu0 %v823
      %1134 = vmatprep.subr.bf16.mxu0 0
      %1135 = vmatpush2.bf16.msra.mxu0 0
      %1136 = vmatprep.subr.bf16.mxu0 0
      %1137 = vmatpush2.bf16.msra.mxu0 0
      %1138 = vmatprep.subr.bf16.mxu0 0
      %1139 = vmatpush2.bf16.msra.mxu0 0
      %1140 = vmatprep.subr.bf16.mxu0 0
      %1141 = vmatpush2.bf16.msra.mxu0 0
      %1142 = vmatprep.subr.bf16.mxu0 0
      %1143 = vmatpush2.bf16.msra.mxu0 0
      %1144 = vmatprep.subr.bf16.mxu0 0
      %1145 = vmatpush2.bf16.msra.mxu0 0
      %1146 = vmatprep.subr.bf16.mxu0 0
      %1147 = vmatpush2.bf16.msra.mxu0 0
      %1148 = vmatprep.subr.bf16.mxu0 0
      %1149 = vmatpush2.bf16.msra.mxu0 0
      %1150 = vmatprep.mubr.bf16.mxu0 0
      %1151 = vmatmul.mubr.bf16.gmra.mxu0 %v302
      %v1152 = vpop.f32.mrf.mxu0
      %v1153 = vadd.f32 %v435, %v1152
      %v1154 = vpop.f32.mrf.mxu0
      %v1155 = vadd.f32 %v435, %v1154
      %v1156 = vpop.f32.mrf.mxu0
      %v1157 = vpop.f32.mrf.mxu0
      %1158 = vdwg.mxu0
      %1159 = vmatprep.subr.bf16.mxu0 %v938
      %1160 = vmatpush1.bf16.msra.mxu0 %v937
      %1161 = vmatprep.subr.bf16.mxu0 %v922
      %1162 = vmatpush1.bf16.msra.mxu0 %v921
      %1163 = vmatprep.subr.bf16.mxu0 %v906
      %1164 = vmatpush1.bf16.msra.mxu0 %v905
      %1165 = vmatprep.subr.bf16.mxu0 %v890
      %1166 = vmatpush1.bf16.msra.mxu0 %v889
      %1167 = vmatprep.subr.bf16.mxu0 %v874
      %1168 = vmatpush1.bf16.msra.mxu0 %v873
      %1169 = vmatprep.subr.bf16.mxu0 %v858
      %1170 = vmatpush1.bf16.msra.mxu0 %v857
      %1171 = vmatprep.subr.bf16.mxu0 %v842
      %1172 = vmatpush1.bf16.msra.mxu0 %v841
      %1173 = vmatprep.subr.bf16.mxu0 %v826
      %1174 = vmatpush1.bf16.msra.mxu0 %v825
      %1175 = vmatprep.subr.bf16.mxu0 0
      %1176 = vmatpush2.bf16.msra.mxu0 0
      %1177 = vmatprep.subr.bf16.mxu0 0
      %1178 = vmatpush2.bf16.msra.mxu0 0
      %1179 = vmatprep.subr.bf16.mxu0 0
      %1180 = vmatpush2.bf16.msra.mxu0 0
      %1181 = vmatprep.subr.bf16.mxu0 0
      %1182 = vmatpush2.bf16.msra.mxu0 0
      %1183 = vmatprep.subr.bf16.mxu0 0
      %1184 = vmatpush2.bf16.msra.mxu0 0
      %1185 = vmatprep.subr.bf16.mxu0 0
      %1186 = vmatpush2.bf16.msra.mxu0 0
      %1187 = vmatprep.subr.bf16.mxu0 0
      %1188 = vmatpush2.bf16.msra.mxu0 0
      %1189 = vmatprep.subr.bf16.mxu0 0
      %1190 = vmatpush2.bf16.msra.mxu0 0
      %1191 = vmatprep.mubr.bf16.mxu0 0
      %1192 = vmatmul.mubr.bf16.gmra.mxu0 %v302
      %v1193 = vpop.f32.mrf.mxu0
      %v1194 = vadd.f32 %v435, %v1193
      %v1195 = vpop.f32.mrf.mxu0
      %v1196 = vadd.f32 %v435, %v1195
      %v1197 = vpop.f32.mrf.mxu0
      %v1198 = vpop.f32.mrf.mxu0
      %1199 = vdwg.mxu0
      %1200 = vmatprep.subr.bf16.mxu0 %v940
      %1201 = vmatpush1.bf16.msra.mxu0 %v939
      %1202 = vmatprep.subr.bf16.mxu0 %v924
      %1203 = vmatpush1.bf16.msra.mxu0 %v923
      %1204 = vmatprep.subr.bf16.mxu0 %v908
      %1205 = vmatpush1.bf16.msra.mxu0 %v907
      %1206 = vmatprep.subr.bf16.mxu0 %v892
      %1207 = vmatpush1.bf16.msra.mxu0 %v891
      %1208 = vmatprep.subr.bf16.mxu0 %v876
      %1209 = vmatpush1.bf16.msra.mxu0 %v875
      %1210 = vmatprep.subr.bf16.mxu0 %v860
      %1211 = vmatpush1.bf16.msra.mxu0 %v859
      %1212 = vmatprep.subr.bf16.mxu0 %v844
      %1213 = vmatpush1.bf16.msra.mxu0 %v843
      %1214 = vmatprep.subr.bf16.mxu0 %v828
      %1215 = vmatpush1.bf16.msra.mxu0 %v827
      %1216 = vmatprep.subr.bf16.mxu0 0
      %1217 = vmatpush2.bf16.msra.mxu0 0
      %1218 = vmatprep.subr.bf16.mxu0 0
      %1219 = vmatpush2.bf16.msra.mxu0 0
      %1220 = vmatprep.subr.bf16.mxu0 0
      %1221 = vmatpush2.bf16.msra.mxu0 0
      %1222 = vmatprep.subr.bf16.mxu0 0
      %1223 = vmatpush2.bf16.msra.mxu0 0
      %1224 = vmatprep.subr.bf16.mxu0 0
      %1225 = vmatpush2.bf16.msra.mxu0 0
      %1226 = vmatprep.subr.bf16.mxu0 0
      %1227 = vmatpush2.bf16.msra.mxu0 0
      %1228 = vmatprep.subr.bf16.mxu0 0
      %1229 = vmatpush2.bf16.msra.mxu0 0
      %1230 = vmatprep.subr.bf16.mxu0 0
      %1231 = vmatpush2.bf16.msra.mxu0 0
      %1232 = vmatprep.mubr.bf16.mxu0 0
      %1233 = vmatmul.mubr.bf16.gmra.mxu0 %v302
      %v1234 = vpop.f32.mrf.mxu0
      %v1235 = vadd.f32 %v435, %v1234
      %v1236 = vpop.f32.mrf.mxu0
      %v1237 = vadd.f32 %v435, %v1236
      %v1238 = vpop.f32.mrf.mxu0
      %v1239 = vpop.f32.mrf.mxu0
      %1240 = vdwg.mxu0
      %1241 = vmatprep.subr.bf16.mxu0 %v942
      %1242 = vmatpush1.bf16.msra.mxu0 %v941
      %1243 = vmatprep.subr.bf16.mxu0 %v926
      %1244 = vmatpush1.bf16.msra.mxu0 %v925
      %1245 = vmatprep.subr.bf16.mxu0 %v910
      %1246 = vmatpush1.bf16.msra.mxu0 %v909
      %1247 = vmatprep.subr.bf16.mxu0 %v894
      %1248 = vmatpush1.bf16.msra.mxu0 %v893
      %1249 = vmatprep.subr.bf16.mxu0 %v878
      %1250 = vmatpush1.bf16.msra.mxu0 %v877
      %1251 = vmatprep.subr.bf16.mxu0 %v862
      %1252 = vmatpush1.bf16.msra.mxu0 %v861
      %1253 = vmatprep.subr.bf16.mxu0 %v846
      %1254 = vmatpush1.bf16.msra.mxu0 %v845
      %1255 = vmatprep.subr.bf16.mxu0 %v830
      %1256 = vmatpush1.bf16.msra.mxu0 %v829
      %1257 = vmatprep.subr.bf16.mxu0 0
      %1258 = vmatpush2.bf16.msra.mxu0 0
      %1259 = vmatprep.subr.bf16.mxu0 0
      %1260 = vmatpush2.bf16.msra.mxu0 0
      %1261 = vmatprep.subr.bf16.mxu0 0
      %1262 = vmatpush2.bf16.msra.mxu0 0
      %1263 = vmatprep.subr.bf16.mxu0 0
      %1264 = vmatpush2.bf16.msra.mxu0 0
      %1265 = vmatprep.subr.bf16.mxu0 0
      %1266 = vmatpush2.bf16.msra.mxu0 0
      %1267 = vmatprep.subr.bf16.mxu0 0
      %1268 = vmatpush2.bf16.msra.mxu0 0
      %1269 = vmatprep.subr.bf16.mxu0 0
      %1270 = vmatpush2.bf16.msra.mxu0 0
      %1271 = vmatprep.subr.bf16.mxu0 0
      %1272 = vmatpush2.bf16.msra.mxu0 0
      %1273 = vmatprep.mubr.bf16.mxu0 0
      %1274 = vmatmul.mubr.bf16.gmra.mxu0 %v302
      %v1275 = vpop.f32.mrf.mxu0
      %v1276 = vadd.f32 %v435, %v1275
      %v1277 = vpop.f32.mrf.mxu0
      %v1278 = vadd.f32 %v435, %v1277
      %v1279 = vpop.f32.mrf.mxu0
      %v1280 = vpop.f32.mrf.mxu0
      %1281 = vdwg.mxu0
      %1282 = vmatprep.subr.bf16.mxu0 %v944
      %1283 = vmatpush1.bf16.msra.mxu0 %v943
      %1284 = vmatprep.subr.bf16.mxu0 %v928
      %1285 = vmatpush1.bf16.msra.mxu0 %v927
      %1286 = vmatprep.subr.bf16.mxu0 %v912
      %1287 = vmatpush1.bf16.msra.mxu0 %v911
      %1288 = vmatprep.subr.bf16.mxu0 %v896
      %1289 = vmatpush1.bf16.msra.mxu0 %v895
      %1290 = vmatprep.subr.bf16.mxu0 %v880
      %1291 = vmatpush1.bf16.msra.mxu0 %v879
      %1292 = vmatprep.subr.bf16.mxu0 %v864
      %1293 = vmatpush1.bf16.msra.mxu0 %v863
      %1294 = vmatprep.subr.bf16.mxu0 %v848
      %1295 = vmatpush1.bf16.msra.mxu0 %v847
      %1296 = vmatprep.subr.bf16.mxu0 %v832
      %1297 = vmatpush1.bf16.msra.mxu0 %v831
      %1298 = vmatprep.subr.bf16.mxu0 0
      %1299 = vmatpush2.bf16.msra.mxu0 0
      %1300 = vmatprep.subr.bf16.mxu0 0
      %1301 = vmatpush2.bf16.msra.mxu0 0
      %1302 = vmatprep.subr.bf16.mxu0 0
      %1303 = vmatpush2.bf16.msra.mxu0 0
      %1304 = vmatprep.subr.bf16.mxu0 0
      %1305 = vmatpush2.bf16.msra.mxu0 0
      %1306 = vmatprep.subr.bf16.mxu0 0
      %1307 = vmatpush2.bf16.msra.mxu0 0
      %1308 = vmatprep.subr.bf16.mxu0 0
      %1309 = vmatpush2.bf16.msra.mxu0 0
      %1310 = vmatprep.subr.bf16.mxu0 0
      %1311 = vmatpush2.bf16.msra.mxu0 0
      %1312 = vmatprep.subr.bf16.mxu0 0
      %1313 = vmatpush2.bf16.msra.mxu0 0
      %1314 = vmatprep.mubr.bf16.mxu0 0
      %1315 = vmatmul.mubr.bf16.gmra.mxu0 %v302
      %v1316 = vpop.f32.mrf.mxu0
      %v1317 = vadd.f32 %v435, %v1316
      %v1318 = vpop.f32.mrf.mxu0
      %v1319 = vadd.f32 %v435, %v1318
      %v1320 = vpop.f32.mrf.mxu0
      %v1321 = vpop.f32.mrf.mxu0
      %1322 = vdwg.mxu0
      %1323 = vmatprep.subr.bf16.mxu0 %v946
      %1324 = vmatpush1.bf16.msra.mxu0 %v945
      %1325 = vmatprep.subr.bf16.mxu0 %v930
      %1326 = vmatpush1.bf16.msra.mxu0 %v929
      %1327 = vmatprep.subr.bf16.mxu0 %v914
      %1328 = vmatpush1.bf16.msra.mxu0 %v913
      %1329 = vmatprep.subr.bf16.mxu0 %v898
      %1330 = vmatpush1.bf16.msra.mxu0 %v897
      %1331 = vmatprep.subr.bf16.mxu0 %v882
      %1332 = vmatpush1.bf16.msra.mxu0 %v881
      %1333 = vmatprep.subr.bf16.mxu0 %v866
      %1334 = vmatpush1.bf16.msra.mxu0 %v865
      %1335 = vmatprep.subr.bf16.mxu0 %v850
      %1336 = vmatpush1.bf16.msra.mxu0 %v849
      %1337 = vmatprep.subr.bf16.mxu0 %v834
      %1338 = vmatpush1.bf16.msra.mxu0 %v833
      %1339 = vmatprep.subr.bf16.mxu0 0
      %1340 = vmatpush2.bf16.msra.mxu0 0
      %1341 = vmatprep.subr.bf16.mxu0 0
      %1342 = vmatpush2.bf16.msra.mxu0 0
      %1343 = vmatprep.subr.bf16.mxu0 0
      %1344 = vmatpush2.bf16.msra.mxu0 0
      %1345 = vmatprep.subr.bf16.mxu0 0
      %1346 = vmatpush2.bf16.msra.mxu0 0
      %1347 = vmatprep.subr.bf16.mxu0 0
      %1348 = vmatpush2.bf16.msra.mxu0 0
      %1349 = vmatprep.subr.bf16.mxu0 0
      %1350 = vmatpush2.bf16.msra.mxu0 0
      %1351 = vmatprep.subr.bf16.mxu0 0
      %1352 = vmatpush2.bf16.msra.mxu0 0
      %1353 = vmatprep.subr.bf16.mxu0 0
      %1354 = vmatpush2.bf16.msra.mxu0 0
      %1355 = vmatprep.mubr.bf16.mxu0 0
      %1356 = vmatmul.mubr.bf16.gmra.mxu0 %v302
      %v1357 = vpop.f32.mrf.mxu0
      %v1358 = vadd.f32 %v435, %v1357
      %v1359 = vpop.f32.mrf.mxu0
      %v1360 = vadd.f32 %v435, %v1359
      %v1361 = vpop.f32.mrf.mxu0
      %v1362 = vpop.f32.mrf.mxu0
      %1363 = vdwg.mxu0
      %1364 = vmatprep.subr.bf16.mxu0 %v948
      %1365 = vmatpush1.bf16.msra.mxu0 %v947
      %1366 = vmatprep.subr.bf16.mxu0 %v932
      %1367 = vmatpush1.bf16.msra.mxu0 %v931
      %1368 = vmatprep.subr.bf16.mxu0 %v916
      %1369 = vmatpush1.bf16.msra.mxu0 %v915
      %1370 = vmatprep.subr.bf16.mxu0 %v900
      %1371 = vmatpush1.bf16.msra.mxu0 %v899
      %1372 = vmatprep.subr.bf16.mxu0 %v884
      %1373 = vmatpush1.bf16.msra.mxu0 %v883
      %1374 = vmatprep.subr.bf16.mxu0 %v868
      %1375 = vmatpush1.bf16.msra.mxu0 %v867
      %1376 = vmatprep.subr.bf16.mxu0 %v852
      %1377 = vmatpush1.bf16.msra.mxu0 %v851
      %1378 = vmatprep.subr.bf16.mxu0 %v836
      %1379 = vmatpush1.bf16.msra.mxu0 %v835
      %1380 = vmatprep.subr.bf16.mxu0 0
      %1381 = vmatpush2.bf16.msra.mxu0 0
      %1382 = vmatprep.subr.bf16.mxu0 0
      %1383 = vmatpush2.bf16.msra.mxu0 0
      %1384 = vmatprep.subr.bf16.mxu0 0
      %1385 = vmatpush2.bf16.msra.mxu0 0
      %1386 = vmatprep.subr.bf16.mxu0 0
      %1387 = vmatpush2.bf16.msra.mxu0 0
      %1388 = vmatprep.subr.bf16.mxu0 0
      %1389 = vmatpush2.bf16.msra.mxu0 0
      %1390 = vmatprep.subr.bf16.mxu0 0
      %1391 = vmatpush2.bf16.msra.mxu0 0
      %1392 = vmatprep.subr.bf16.mxu0 0
      %1393 = vmatpush2.bf16.msra.mxu0 0
      %1394 = vmatprep.subr.bf16.mxu0 0
      %1395 = vmatpush2.bf16.msra.mxu0 0
      %1396 = vmatprep.mubr.bf16.mxu0 0
      %1397 = vmatmul.mubr.bf16.gmra.mxu0 %v302
      %v1398 = vpop.f32.mrf.mxu0
      %v1399 = vadd.f32 %v435, %v1398
      %v1400 = vpop.f32.mrf.mxu0
      %v1401 = vadd.f32 %v435, %v1400
      %v1402 = vpop.f32.mrf.mxu0
      %v1403 = vpop.f32.mrf.mxu0
      %1404 = vdwg.mxu0
      %v1405 = vmax.f32 %v1112, 0.0
      %v1406 = vmax.f32 %v1114, 0.0
      %v1407 = vmax.f32 %v1153, 0.0
      %v1408 = vmax.f32 %v1155, 0.0
      %v1409 = vmax.f32 %v1194, 0.0
      %v1410 = vmax.f32 %v1196, 0.0
      %v1411 = vmax.f32 %v1235, 0.0
      %v1412 = vmax.f32 %v1237, 0.0
      %v1413 = vmax.f32 %v1276, 0.0
      %v1414 = vmax.f32 %v1278, 0.0
      %v1415 = vmax.f32 %v1317, 0.0
      %v1416 = vmax.f32 %v1319, 0.0
      %v1417 = vmax.f32 %v1358, 0.0
      %v1418 = vmax.f32 %v1360, 0.0
      %v1419 = vmax.f32 %v1399, 0.0
      %v1420 = vmax.f32 %v1401, 0.0
      %s1421 = smul.u32 %s22, 2048
      %v1422 = vlaneseq
      %v1423 = vand.u32 %v1422, 127
      %v1424 = vadd.s32 %v1423, 128
      %v1425 = vadd.s32 %v1423, 256
      %v1426 = vadd.s32 %v1423, 384
      %v1427 = vadd.s32 %v1423, 512
      %v1428 = vadd.s32 %v1423, 640
      %v1429 = vadd.s32 %v1423, 768
      %v1430 = vadd.s32 %v1423, 896
      %v1431 = vadd.s32 %v1423, 1024
      %v1432 = vadd.s32 %v1423, 1152
      %v1433 = vadd.s32 %v1423, 1280
      %v1434 = vadd.s32 %v1423, 1408
      %v1435 = vadd.s32 %v1423, 1536
      %v1436 = vadd.s32 %v1423, 1664
      %v1437 = vadd.s32 %v1423, 1792
      %v1438 = vadd.s32 %v1423, 1920
      %v1439 = vstv %s1421
      %v1440 = vadd.s32 %v1439, %v1423
      %v1441 = vadd.s32 %v1439, %v1424
      %v1442 = vadd.s32 %v1439, %v1425
      %v1443 = vadd.s32 %v1439, %v1426
      %v1444 = vadd.s32 %v1439, %v1427
      %v1445 = vadd.s32 %v1439, %v1428
      %v1446 = vadd.s32 %v1439, %v1429
      %v1447 = vadd.s32 %v1439, %v1430
      %v1448 = vadd.s32 %v1439, %v1431
      %v1449 = vadd.s32 %v1439, %v1432
      %v1450 = vadd.s32 %v1439, %v1433
      %v1451 = vadd.s32 %v1439, %v1434
      %v1452 = vadd.s32 %v1439, %v1435
      %v1453 = vadd.s32 %v1439, %v1436
      %v1454 = vadd.s32 %v1439, %v1437
      %v1455 = vadd.s32 %v1439, %v1438
      %vm1456 = vcmp.lt.s32.totalorder %v1440, 2048
      %vm1457 = vcmp.lt.s32.totalorder %v1441, 2048
      %vm1458 = vcmp.lt.s32.totalorder %v1442, 2048
      %vm1459 = vcmp.lt.s32.totalorder %v1443, 2048
      %vm1460 = vcmp.lt.s32.totalorder %v1444, 2048
      %vm1461 = vcmp.lt.s32.totalorder %v1445, 2048
      %vm1462 = vcmp.lt.s32.totalorder %v1446, 2048
      %vm1463 = vcmp.lt.s32.totalorder %v1447, 2048
      %vm1464 = vcmp.lt.s32.totalorder %v1448, 2048
      %vm1465 = vcmp.lt.s32.totalorder %v1449, 2048
      %vm1466 = vcmp.lt.s32.totalorder %v1450, 2048
      %vm1467 = vcmp.lt.s32.totalorder %v1451, 2048
      %vm1468 = vcmp.lt.s32.totalorder %v1452, 2048
      %vm1469 = vcmp.lt.s32.totalorder %v1453, 2048
      %vm1470 = vcmp.lt.s32.totalorder %v1454, 2048
      %vm1471 = vcmp.lt.s32.totalorder %v1455, 2048
      %v1472 = vsel %vm1456, %v1405, 0.0
      %v1473 = vsel %vm1457, %v1406, 0.0
      %v1474 = vsel %vm1458, %v1407, 0.0
      %v1475 = vsel %vm1459, %v1408, 0.0
      %v1476 = vsel %vm1460, %v1409, 0.0
      %v1477 = vsel %vm1461, %v1410, 0.0
      %v1478 = vsel %vm1462, %v1411, 0.0
      %v1479 = vsel %vm1463, %v1412, 0.0
      %v1480 = vsel %vm1464, %v1413, 0.0
      %v1481 = vsel %vm1465, %v1414, 0.0
      %v1482 = vsel %vm1466, %v1415, 0.0
      %v1483 = vsel %vm1467, %v1416, 0.0
      %v1484 = vsel %vm1468, %v1417, 0.0
      %v1485 = vsel %vm1469, %v1418, 0.0
      %v1486 = vsel %vm1470, %v1419, 0.0
      %v1487 = vsel %vm1471, %v1420, 0.0
      %1488 = vst [vmem:[%s285] sm:$0xff] %v1472
      %1489 = vst [vmem:[%s285 + $0x8] sm:$0xff] %v1473
      %1490 = vst [vmem:[%s285 + $0x10] sm:$0xff] %v1474
      %1491 = vst [vmem:[%s285 + $0x18] sm:$0xff] %v1475
      %1492 = vst [vmem:[%s285 + $0x20] sm:$0xff] %v1476
      %1493 = vst [vmem:[%s285 + $0x28] sm:$0xff] %v1477
      %1494 = vst [vmem:[%s285 + $0x30] sm:$0xff] %v1478
      %1495 = vst [vmem:[%s285 + $0x38] sm:$0xff] %v1479
      %1496 = vst [vmem:[%s285 + $0x40] sm:$0xff] %v1480
      %1497 = vst [vmem:[%s285 + $0x48] sm:$0xff] %v1481
      %1498 = vst [vmem:[%s285 + $0x50] sm:$0xff] %v1482
      %1499 = vst [vmem:[%s285 + $0x58] sm:$0xff] %v1483
      %1500 = vst [vmem:[%s285 + $0x60] sm:$0xff] %v1484
      %1501 = vst [vmem:[%s285 + $0x68] sm:$0xff] %v1485
      %1502 = vst [vmem:[%s285 + $0x70] sm:$0xff] %v1486
      %1503 = vst [vmem:[%s285 + $0x78] sm:$0xff] %v1487
      %v1504 = vadd.f32 %v1472, %v1473
      %v1505 = vadd.f32 %v1504, %v1474
      %v1506 = vadd.f32 %v1505, %v1475
      %v1507 = vadd.f32 %v1506, %v1476
      %v1508 = vadd.f32 %v1507, %v1477
      %v1509 = vadd.f32 %v1508, %v1478
      %v1510 = vadd.f32 %v1509, %v1479
      %v1511 = vadd.f32 %v1510, %v1480
      %v1512 = vadd.f32 %v1511, %v1481
      %v1513 = vadd.f32 %v1512, %v1482
      %v1514 = vadd.f32 %v1513, %v1483
      %v1515 = vadd.f32 %v1514, %v1484
      %v1516 = vadd.f32 %v1515, %v1485
      %v1517 = vadd.f32 %v1516, %v1486
      %v1518 = vadd.f32 %v1517, %v1487
      %1519 = vadd.xlane.f32.xlu0 %v1518
      %v1520 = vpop.xlane.xlu0 %1519
      %vm1521 = vcmask 7168
      %1522 = vst.msk [vmem:[%s293] sm:$0xff] %vm1521, %v1520
      %v1523 = vmul.f32 %v1472, %v1472
      %v1524 = vmul.f32 %v1473, %v1473
      %v1525 = vmul.f32 %v1474, %v1474
      %v1526 = vmul.f32 %v1475, %v1475
      %v1527 = vmul.f32 %v1476, %v1476
      %v1528 = vmul.f32 %v1477, %v1477
      %v1529 = vmul.f32 %v1478, %v1478
      %v1530 = vmul.f32 %v1479, %v1479
      %v1531 = vmul.f32 %v1480, %v1480
      %v1532 = vmul.f32 %v1481, %v1481
      %v1533 = vmul.f32 %v1482, %v1482
      %v1534 = vmul.f32 %v1483, %v1483
      %v1535 = vmul.f32 %v1484, %v1484
      %v1536 = vmul.f32 %v1485, %v1485
      %v1537 = vmul.f32 %v1486, %v1486
      %v1538 = vmul.f32 %v1487, %v1487
      %v1539 = vadd.f32 %v1523, %v1524
      %v1540 = vadd.f32 %v1539, %v1525
      %v1541 = vadd.f32 %v1540, %v1526
      %v1542 = vadd.f32 %v1541, %v1527
      %v1543 = vadd.f32 %v1542, %v1528
      %v1544 = vadd.f32 %v1543, %v1529
      %v1545 = vadd.f32 %v1544, %v1530
      %v1546 = vadd.f32 %v1545, %v1531
      %v1547 = vadd.f32 %v1546, %v1532
      %v1548 = vadd.f32 %v1547, %v1533
      %v1549 = vadd.f32 %v1548, %v1534
      %v1550 = vadd.f32 %v1549, %v1535
      %v1551 = vadd.f32 %v1550, %v1536
      %v1552 = vadd.f32 %v1551, %v1537
      %v1553 = vadd.f32 %v1552, %v1538
      %1554 = vadd.xlane.f32.xlu0 %v1553
      %v1555 = vpop.xlane.xlu0 %1554
      %1556 = vst.msk [vmem:[%s300] sm:$0xff] %vm1521, %v1555
      %s1557 = smul.u32 16, %s22
      %p1558 = scmp.lt.s32.totalorder %s21, 1
      %s1559 = scalar_select %p1558, %s21, 1
      %p1560 = scmp.lt.s32.totalorder %s1557, 15
      %s1561 = scalar_select %p1560, %s1557, 15
      %s1562 = smul.addr %s1559, 16
      %s1563 = sadd.s32 %s1561, %s1562
      %s1564 = smul.addr %s1563, 8
      %s1565 = scalar_lea.vmem %s3, %s1564
      %p1566 = scmp.lt.s32.totalorder %s21, 1
      %s1567 = scalar_select %p1566, %s21, 1
      %p1568 = scmp.lt.s32.totalorder %s22, 0
      %s1569 = scalar_select %p1568, %s22, 0
      %s1570 = sadd.s32 %s1569, %s1567
      %s1571 = smul.addr %s1570, 8
      %s1572 = scalar_lea.vmem %s4, %s1571
      %p1573 = scmp.lt.s32.totalorder %s21, 1
      %s1574 = scalar_select %p1573, %s21, 1
      %p1575 = scmp.lt.s32.totalorder %s22, 0
      %s1576 = scalar_select %p1575, %s22, 0
      %s1577 = sadd.s32 %s1576, %s1574
      %s1578 = smul.addr %s1577, 8
      %s1579 = scalar_lea.vmem %s5, %s1578
      // Predicated region
      $region33: #{res_conv3d_block.2} parent=31 // pred_check
        %p1580 = pneg %p119
      $region34: #{res_conv3d_block.2} parent=31 // pred_check_branch
        %1582 = sbr.rel (%p1580) target = $region36
      $region35: #{res_conv3d_block.2} parent=31 // pred_region
        %s1583 = smul.u32 16, %s22
      $region36: #{res_conv3d_block.2} parent=31 // pred_fallthru
        _
      // Predicated region
      $region37: #{res_conv3d_block.2} parent=31 // pred_check
        %p1584 = pneg %p147
      $region38: #{res_conv3d_block.2} parent=31 // pred_check_branch
        %1586 = sbr.rel (%p1584) target = $region40
      $region39: #{res_conv3d_block.2} parent=31 // pred_region
        _
      $region40: #{res_conv3d_block.2} parent=31 // pred_fallthru
        _
      // Predicated region
      $region41: #{res_conv3d_block.2} parent=31 // pred_check
        %p1587 = pneg %p175
      $region42: #{res_conv3d_block.2} parent=31 // pred_check_branch
        %1589 = sbr.rel (%p1587) target = $region44
      $region43: #{res_conv3d_block.2} parent=31 // pred_region
        _
      $region44: #{res_conv3d_block.2} parent=31 // pred_fallthru
        _
    $region32: #{res_conv3d_block.2} parent=5 // pred_fallthru
      _
    %p1590 = scmp.le.s32.totalorder 2, %s12
    // Predicated region
    $region45: #{res_conv3d_block.2} parent=5 // pred_check
      %p1591 = pneg %p1590
    $region46: #{res_conv3d_block.2} parent=5 // pred_check_branch
      %1593 = sbr.rel (%p1591) target = $region48
    $region47: #{res_conv3d_block.2} parent=5 // pred_region
      %s1594 = ssub.s32 %s12, 2
      // Predicated region
      $region49: #{res_conv3d_block.2} parent=47 // pred_check
        %p1595 = pneg %p125
      $region50: #{res_conv3d_block.2} parent=47 // pred_check_branch
        %1597 = sbr.rel (%p1595) target = $region52
      $region51: #{res_conv3d_block.2} parent=47 // pred_region
        %s1598 = smul.u32 16, %s24
        %p1599 = scmp.lt.s32.totalorder %s23, 1
        %s1600 = scalar_select %p1599, %s23, 1
        %p1601 = scmp.lt.s32.totalorder %s1598, 15
        %s1602 = scalar_select %p1601, %s1598, 15
        %s1603 = smul.addr %s1600, 16
        %s1604 = sadd.s32 %s1602, %s1603
        %s1605 = smul.addr %s1604, 8
        %s1606 = scalar_lea.vmem %s3, %s1605
      $region52: #{res_conv3d_block.2} parent=47 // pred_fallthru
        _
      // Predicated region
      $region53: #{res_conv3d_block.2} parent=47 // pred_check
        %p1607 = pneg %p153
      $region54: #{res_conv3d_block.2} parent=47 // pred_check_branch
        %1609 = sbr.rel (%p1607) target = $region56
      $region55: #{res_conv3d_block.2} parent=47 // pred_region
        %p1610 = scmp.lt.s32.totalorder %s23, 1
        %s1611 = scalar_select %p1610, %s23, 1
        %p1612 = scmp.lt.s32.totalorder %s24, 0
        %s1613 = scalar_select %p1612, %s24, 0
        %s1614 = sadd.s32 %s1613, %s1611
        %s1615 = smul.addr %s1614, 8
        %s1616 = scalar_lea.vmem %s4, %s1615
      $region56: #{res_conv3d_block.2} parent=47 // pred_fallthru
        _
      // Predicated region
      $region57: #{res_conv3d_block.2} parent=47 // pred_check
        %p1617 = pneg %p181
      $region58: #{res_conv3d_block.2} parent=47 // pred_check_branch
        %1619 = sbr.rel (%p1617) target = $region60
      $region59: #{res_conv3d_block.2} parent=47 // pred_region
        %p1620 = scmp.lt.s32.totalorder %s23, 1
        %s1621 = scalar_select %p1620, %s23, 1
        %p1622 = scmp.lt.s32.totalorder %s24, 0
        %s1623 = scalar_select %p1622, %s24, 0
        %s1624 = sadd.s32 %s1623, %s1621
        %s1625 = smul.addr %s1624, 8
        %s1626 = scalar_lea.vmem %s5, %s1625
      $region60: #{res_conv3d_block.2} parent=47 // pred_fallthru
        _
    $region48: #{res_conv3d_block.2} parent=5 // pred_fallthru
      _
  $region6: #{res_conv3d_block.2} parent=0 // loop_footer
    %s16 = sadd.s32 1, %s12
  $region7: #{res_conv3d_block.2} parent=0 // loop_footer_branch
    %11 = sbr.rel target = $region3
  $region8: #{res_conv3d_block.2} parent=0 // loop_exit
    _

// kernel: res_conv3d_block.3
$region0: #{res_conv3d_block.3}
  #allocation0 [shape = 'u32[]', space=smem, size = 0x4, offset = 0x4, fixed_abs, tag = 'smem constant byte address 0x4 - core index']
  #allocation1 [shape = 'u32[144,128]{1,0:T(1,128)}', space=vmem, size = 0x12000, scoped, tag = 'internal scratch']
  %s0 = inlined_call_operand.vmem [shape: f32[2,8,2048], index: 0, kind: input, shape index: {}, may-alias: {0,3}]
  %s1 = inlined_call_operand.vmem [shape: f32[2,8,1], index: 1, kind: input, shape index: {}]
  %s2 = inlined_call_operand.vmem [shape: f32[2,8,1], index: 2, kind: input, shape index: {}]
  %s3 = inlined_call_operand.vmem [shape: f32[2,8,2048], index: 3, kind: output, shape index: {}, may-alias: {0,3}]
  %s4 = sld [smem:[#allocation0]]
  $region45: #{res_conv3d_block.3} parent=0
    _
  %s6 = ssub.s32 1, %s4
  %s7 = scalar_select 0, %s6, %s4
  loop: start=0, step=1, limit=4
  $region2: #{res_conv3d_block.3} parent=0 // loop_pre_header
    _
  $region3: #{res_conv3d_block.3} parent=0 // loop_header
    %s9 = sphi 0, %s13
    %p10 = scmp.ge.s32.totalorder %s9, 4
    %s16 = sphi 0, %s28
    %s17 = sphi 0, %s24
    %s18 = sphi 0, %s16
    %s19 = sphi 0, %s17
    %s20 = sphi 0, %s18
    %s21 = sphi 0, %s19
    %s33 = sphi 0, %s35
    %s36 = sphi 0, %s33
    %s37 = sphi 0, %s36
    %s53 = sphi 0, %s37
    %s59 = sphi 0, %s61
    %s62 = sphi 0, %s59
    %s63 = sphi 0, %s62
    %s79 = sphi 0, %s63
    %s85 = sphi 0, %s87
    %s88 = sphi 0, %s85
    %s89 = sphi 0, %s88
    %s105 = sphi 0, %s89
    %s113 = sphi 0, %s115
    %s116 = sphi 0, %s113
    %s117 = sphi 0, %s116
    %s133 = sphi 0, %s117
  $region4: #{res_conv3d_block.3} parent=0 // loop_header_branch
    %12 = sbr.rel (%p10) target = $region8
  $region5: #{res_conv3d_block.3} parent=0 // loop_body
    %s14 = ssub.s32 %s9, 1
    %s15 = ssub.s32 %s9, 2
    %s22 = sadd.s32 1, %s17
    %p23 = scmp.ge.s32.totalorder %s22, 1
    %s24 = scalar_select %p23, 0, %s22
    %s25 = sadd.s32 1, %s16
    %s26 = scalar_select %p23, %s25, %s16
    %p27 = scmp.ge.s32.totalorder %s26, 2
    %s28 = scalar_select %p27, 0, %s26
    %s29 = ssub.s32 %s16, %s28
    %s30 = ssub.s32 %s17, %s24
    %s31 = sor.u32 %s29, %s30
    %p32 = scmp.eq.s32.totalorder %s31, 0
    %s34 = sadd.s32 %s33, 1
    %s35 = scalar_select %p32, %s33, %s34
    %p38 = pneg %p32
    %p39 = scmp.eq.s32.totalorder %s9, 1
    %p40 = por %p38, %p39
    %p41 = scmp.ne.s32.totalorder %s33, %s36
    %p42 = scmp.eq.s32.totalorder %s9, 0
    %p43 = por %p41, %p42
    %p44 = scmp.ne.s32.totalorder %s33, %s36
    %p45 = scmp.eq.s32.totalorder %s14, 1
    %p46 = por %p44, %p45
    %p47 = scmp.ne.s32.totalorder %s36, %s37
    %p48 = scmp.eq.s32.totalorder %s14, 0
    %p49 = por %p47, %p48
    %p50 = scmp.ne.s32.totalorder %s36, %s37
    %p51 = scmp.eq.s32.totalorder %s15, 1
    %p52 = por %p50, %p51
    %p54 = scmp.ne.s32.totalorder %s37, %s53
    %p55 = scmp.eq.s32.totalorder %s15, 0
    %p56 = por %p54, %p55
    %s57 = ssub.s32 %s16, %s28
    %p58 = scmp.eq.s32.totalorder %s57, 0
    %s60 = sadd.s32 %s59, 1
    %s61 = scalar_select %p58, %s59, %s60
    %p64 = pneg %p58
    %p65 = scmp.eq.s32.totalorder %s9, 1
    %p66 = por %p64, %p65
    %p67 = scmp.ne.s32.totalorder %s59, %s62
    %p68 = scmp.eq.s32.totalorder %s9, 0
    %p69 = por %p67, %p68
    %p70 = scmp.ne.s32.totalorder %s59, %s62
    %p71 = scmp.eq.s32.totalorder %s14, 1
    %p72 = por %p70, %p71
    %p73 = scmp.ne.s32.totalorder %s62, %s63
    %p74 = scmp.eq.s32.totalorder %s14, 0
    %p75 = por %p73, %p74
    %p76 = scmp.ne.s32.totalorder %s62, %s63
    %p77 = scmp.eq.s32.totalorder %s15, 1
    %p78 = por %p76, %p77
    %p80 = scmp.ne.s32.totalorder %s63, %s79
    %p81 = scmp.eq.s32.totalorder %s15, 0
    %p82 = por %p80, %p81
    %s83 = ssub.s32 %s16, %s28
    %p84 = scmp.eq.s32.totalorder %s83, 0
    %s86 = sadd.s32 %s85, 1
    %s87 = scalar_select %p84, %s85, %s86
    %p90 = pneg %p84
    %p91 = scmp.eq.s32.totalorder %s9, 1
    %p92 = por %p90, %p91
    %p93 = scmp.ne.s32.totalorder %s85, %s88
    %p94 = scmp.eq.s32.totalorder %s9, 0
    %p95 = por %p93, %p94
    %p96 = scmp.ne.s32.totalorder %s85, %s88
    %p97 = scmp.eq.s32.totalorder %s14, 1
    %p98 = por %p96, %p97
    %p99 = scmp.ne.s32.totalorder %s88, %s89
    %p100 = scmp.eq.s32.totalorder %s14, 0
    %p101 = por %p99, %p100
    %p102 = scmp.ne.s32.totalorder %s88, %s89
    %p103 = scmp.eq.s32.totalorder %s15, 1
    %p104 = por %p102, %p103
    %p106 = scmp.ne.s32.totalorder %s89, %s105
    %p107 = scmp.eq.s32.totalorder %s15, 0
    %p108 = por %p106, %p107
    %s109 = ssub.s32 %s16, %s28
    %s110 = ssub.s32 %s17, %s24
    %s111 = sor.u32 %s109, %s110
    %p112 = scmp.eq.s32.totalorder %s111, 0
    %s114 = sadd.s32 %s113, 1
    %s115 = scalar_select %p112, %s113, %s114
    %p118 = pneg %p112
    %p119 = scmp.eq.s32.totalorder %s9, 1
    %p120 = por %p118, %p119
    %p121 = scmp.ne.s32.totalorder %s113, %s116
    %p122 = scmp.eq.s32.totalorder %s9, 0
    %p123 = por %p121, %p122
    %p124 = scmp.ne.s32.totalorder %s113, %s116
    %p125 = scmp.eq.s32.totalorder %s14, 1
    %p126 = por %p124, %p125
    %p127 = scmp.ne.s32.totalorder %s116, %s117
    %p128 = scmp.eq.s32.totalorder %s14, 0
    %p129 = por %p127, %p128
    %p130 = scmp.ne.s32.totalorder %s116, %s117
    %p131 = scmp.eq.s32.totalorder %s15, 1
    %p132 = por %p130, %p131
    %p134 = scmp.ne.s32.totalorder %s117, %s133
    %p135 = scmp.eq.s32.totalorder %s15, 0
    %p136 = por %p134, %p135
    %p137 = scmp.le.s32.totalorder 1, %s9
    %p138 = scmp.lt.s32.totalorder %s9, 3
    %p139 = pnand %p137, %p138
    %p140 = pneg %p139
    // Predicated region
    $region9: #{res_conv3d_block.3} parent=5 // pred_check
      _
    $region10: #{res_conv3d_block.3} parent=5 // pred_check_branch
      %142 = sbr.rel (%p139) target = $region12
    $region11: #{res_conv3d_block.3} parent=5 // pred_region
      %s143 = ssub.s32 %s9, 1
    $region12: #{res_conv3d_block.3} parent=5 // pred_fallthru
      _
    %p144 = scmp.lt.s32.totalorder %s9, 2
    // Predicated region
    $region13: #{res_conv3d_block.3} parent=5 // pred_check
      %p145 = pneg %p144
    $region14: #{res_conv3d_block.3} parent=5 // pred_check_branch
      %147 = sbr.rel (%p145) target = $region16
    $region15: #{res_conv3d_block.3} parent=5 // pred_region
      // Predicated region
      $region17: #{res_conv3d_block.3} parent=15 // pred_check
        %p148 = pneg %p43
      $region18: #{res_conv3d_block.3} parent=15 // pred_check_branch
        %150 = sbr.rel (%p148) target = $region20
      $region19: #{res_conv3d_block.3} parent=15 // pred_region
        %s151 = smul.u32 16, %s17
        %p152 = scmp.lt.s32.totalorder %s16, 1
        %s153 = scalar_select %p152, %s16, 1
        %p154 = scmp.lt.s32.totalorder %s151, 15
        %s155 = scalar_select %p154, %s151, 15
        %s156 = smul.addr %s153, 16
        %s157 = sadd.s32 %s155, %s156
        %s158 = smul.addr %s157, 8
        %s159 = scalar_lea.vmem %s0, %s158
        %s160 = smul.u32 16, %s17
      $region20: #{res_conv3d_block.3} parent=15 // pred_fallthru
        _
      // Predicated region
      $region21: #{res_conv3d_block.3} parent=15 // pred_check
        %p161 = pneg %p69
      $region22: #{res_conv3d_block.3} parent=15 // pred_check_branch
        %163 = sbr.rel (%p161) target = $region24
      $region23: #{res_conv3d_block.3} parent=15 // pred_region
        %p164 = scmp.lt.s32.totalorder %s16, 1
        %s165 = scalar_select %p164, %s16, 1
        %s166 = smul.addr %s165, 8
        %s167 = scalar_lea.vmem %s1, %s166
      $region24: #{res_conv3d_block.3} parent=15 // pred_fallthru
        _
      // Predicated region
      $region25: #{res_conv3d_block.3} parent=15 // pred_check
        %p168 = pneg %p95
      $region26: #{res_conv3d_block.3} parent=15 // pred_check_branch
        %170 = sbr.rel (%p168) target = $region28
      $region27: #{res_conv3d_block.3} parent=15 // pred_region
        %p171 = scmp.lt.s32.totalorder %s16, 1
        %s172 = scalar_select %p171, %s16, 1
        %s173 = smul.addr %s172, 8
        %s174 = scalar_lea.vmem %s2, %s173
      $region28: #{res_conv3d_block.3} parent=15 // pred_fallthru
        _
    $region16: #{res_conv3d_block.3} parent=5 // pred_fallthru
      _
    %p175 = scmp.le.s32.totalorder 1, %s9
    %p176 = scmp.lt.s32.totalorder %s9, 3
    %p177 = pnand %p175, %p176
    %p178 = pneg %p177
    // Predicated region
    $region29: #{res_conv3d_block.3} parent=5 // pred_check
      _
    $region30: #{res_conv3d_block.3} parent=5 // pred_check_branch
      %180 = sbr.rel (%p177) target = $region32
    $region31: #{res_conv3d_block.3} parent=5 // pred_region
      %s181 = ssub.s32 %s9, 1
      %s182 = smul.u32 16, %s19
      %p183 = scmp.lt.s32.totalorder %s18, 1
      %s184 = scalar_select %p183, %s18, 1
      %p185 = scmp.lt.s32.totalorder %s182, 15
      %s186 = scalar_select %p185, %s182, 15
      %s187 = smul.addr %s184, 16
      %s188 = sadd.s32 %s186, %s187
      %s189 = smul.addr %s188, 8
      %s190 = scalar_lea.vmem %s0, %s189
      %p191 = pneg %p49
      %p192 = pneg %p46
      %p193 = scmp.lt.s32.totalorder %s18, 1
      %s194 = scalar_select %p193, %s18, 1
      %s195 = smul.addr %s194, 8
      %s196 = scalar_lea.vmem %s1, %s195
      %p197 = pneg %p75
      %p198 = pneg %p72
      %p199 = scmp.lt.s32.totalorder %s18, 1
      %s200 = scalar_select %p199, %s18, 1
      %s201 = smul.addr %s200, 8
      %s202 = scalar_lea.vmem %s2, %s201
      %p203 = pneg %p101
      %p204 = pneg %p98
      %p205 = pneg %p129
      %p206 = pneg %p126
      %s207 = smul.u32 16, %s19
      %p208 = scmp.lt.s32.totalorder %s18, 1
      %s209 = scalar_select %p208, %s18, 1
      %p210 = scmp.lt.s32.totalorder %s207, 15
      %s211 = scalar_select %p210, %s207, 15
      %s212 = smul.addr %s209, 16
      %s213 = sadd.s32 %s211, %s212
      %s214 = smul.addr %s213, 8
      %s215 = scalar_lea.vmem %s3, %s214
      %s216 = smul.u32 16, %s19
      %p217 = scmp.lt.s32.totalorder %s18, 1
      %s218 = scalar_select %p217, %s18, 1
      %p219 = scmp.lt.s32.totalorder %s216, 15
      %s220 = scalar_select %p219, %s216, 15
      %s221 = smul.addr %s218, 16
      %s222 = sadd.s32 %s220, %s221
      %s223 = smul.addr %s222, 8
      %s224 = scalar_lea.vmem %s0, %s223
      %s225 = smul.u32 16, %s19
      %p226 = scmp.lt.s32.totalorder %s18, 1
      %s227 = scalar_select %p226, %s18, 1
      %s228 = smul.addr %s227, 8
      %s229 = scalar_lea.vmem %s1, %s228
      %p230 = scmp.lt.s32.totalorder %s18, 1
      %s231 = scalar_select %p230, %s18, 1
      %s232 = smul.addr %s231, 8
      %s233 = scalar_lea.vmem %s2, %s232
      %s234 = smul.u32 16, %s19
      %p235 = scmp.lt.s32.totalorder %s18, 1
      %s236 = scalar_select %p235, %s18, 1
      %p237 = scmp.lt.s32.totalorder %s234, 15
      %s238 = scalar_select %p237, %s234, 15
      %s239 = smul.addr %s236, 16
      %s240 = sadd.s32 %s238, %s239
      %s241 = smul.addr %s240, 8
      %s242 = scalar_lea.vmem %s3, %s241
      %s243 = smul.u32 16, %s19
      %v244 = vld [vmem:[%s224] sm:$0xff]
      %v245 = vld [vmem:[%s224 + $0x8] sm:$0xff]
      %v246 = vld [vmem:[%s224 + $0x10] sm:$0xff]
      %v247 = vld [vmem:[%s224 + $0x18] sm:$0xff]
      %v248 = vld [vmem:[%s224 + $0x20] sm:$0xff]
      %v249 = vld [vmem:[%s224 + $0x28] sm:$0xff]
      %v250 = vld [vmem:[%s224 + $0x30] sm:$0xff]
      %v251 = vld [vmem:[%s224 + $0x38] sm:$0xff]
      %v252 = vld [vmem:[%s224 + $0x40] sm:$0xff]
      %v253 = vld [vmem:[%s224 + $0x48] sm:$0xff]
      %v254 = vld [vmem:[%s224 + $0x50] sm:$0xff]
      %v255 = vld [vmem:[%s224 + $0x58] sm:$0xff]
      %v256 = vld [vmem:[%s224 + $0x60] sm:$0xff]
      %v257 = vld [vmem:[%s224 + $0x68] sm:$0xff]
      %v258 = vld [vmem:[%s224 + $0x70] sm:$0xff]
      %v259 = vld [vmem:[%s224 + $0x78] sm:$0xff]
      %v260 = vld [vmem:[%s229] sm:$0xff]
      %262 = vset.pattern.permute.xlu0 0
      %263 = vperm.xlu0 %262, %v260
      %v264 = vpop.permute.xlu0 %263
      %v266 = vsub.f32 %v244, %v264
      %v267 = vsub.f32 %v245, %v264
      %v268 = vsub.f32 %v246, %v264
      %v269 = vsub.f32 %v247, %v264
      %v270 = vsub.f32 %v248, %v264
      %v271 = vsub.f32 %v249, %v264
      %v272 = vsub.f32 %v250, %v264
      %v273 = vsub.f32 %v251, %v264
      %v274 = vsub.f32 %v252, %v264
      %v275 = vsub.f32 %v253, %v264
      %v276 = vsub.f32 %v254, %v264
      %v277 = vsub.f32 %v255, %v264
      %v278 = vsub.f32 %v256, %v264
      %v279 = vsub.f32 %v257, %v264
      %v280 = vsub.f32 %v258, %v264
      %v281 = vsub.f32 %v259, %v264
      %v282 = vld [vmem:[%s233] sm:$0xff]
      %284 = vset.pattern.permute.xlu0 0
      %285 = vperm.xlu0 %284, %v282
      %v286 = vpop.permute.xlu0 %285
      %v288 = vmul.f32 %v266, %v286
      %v289 = vmul.f32 %v267, %v286
      %v290 = vmul.f32 %v268, %v286
      %v291 = vmul.f32 %v269, %v286
      %v292 = vmul.f32 %v270, %v286
      %v293 = vmul.f32 %v271, %v286
      %v294 = vmul.f32 %v272, %v286
      %v295 = vmul.f32 %v273, %v286
      %v296 = vmul.f32 %v274, %v286
      %v297 = vmul.f32 %v275, %v286
      %v298 = vmul.f32 %v276, %v286
      %v299 = vmul.f32 %v277, %v286
      %v300 = vmul.f32 %v278, %v286
      %v301 = vmul.f32 %v279, %v286
      %v302 = vmul.f32 %v280, %v286
      %v303 = vmul.f32 %v281, %v286
      %304 = vst [vmem:[%s242] sm:$0xff] %v288
      %305 = vst [vmem:[%s242 + $0x8] sm:$0xff] %v289
      %306 = vst [vmem:[%s242 + $0x10] sm:$0xff] %v290
      %307 = vst [vmem:[%s242 + $0x18] sm:$0xff] %v291
      %308 = vst [vmem:[%s242 + $0x20] sm:$0xff] %v292
      %309 = vst [vmem:[%s242 + $0x28] sm:$0xff] %v293
      %310 = vst [vmem:[%s242 + $0x30] sm:$0xff] %v294
      %311 = vst [vmem:[%s242 + $0x38] sm:$0xff] %v295
      %312 = vst [vmem:[%s242 + $0x40] sm:$0xff] %v296
      %313 = vst [vmem:[%s242 + $0x48] sm:$0xff] %v297
      %314 = vst [vmem:[%s242 + $0x50] sm:$0xff] %v298
      %315 = vst [vmem:[%s242 + $0x58] sm:$0xff] %v299
      %316 = vst [vmem:[%s242 + $0x60] sm:$0xff] %v300
      %317 = vst [vmem:[%s242 + $0x68] sm:$0xff] %v301
      %318 = vst [vmem:[%s242 + $0x70] sm:$0xff] %v302
      %319 = vst [vmem:[%s242 + $0x78] sm:$0xff] %v303
      %s320 = smul.u32 16, %s19
      %p321 = scmp.lt.s32.totalorder %s18, 1
      %s322 = scalar_select %p321, %s18, 1
      %p323 = scmp.lt.s32.totalorder %s320, 15
      %s324 = scalar_select %p323, %s320, 15
      %s325 = smul.addr %s322, 16
      %s326 = sadd.s32 %s324, %s325
      %s327 = smul.addr %s326, 8
      %s328 = scalar_lea.vmem %s3, %s327
      // Predicated region
      $region33: #{res_conv3d_block.3} parent=31 // pred_check
        %p329 = pneg %p126
      $region34: #{res_conv3d_block.3} parent=31 // pred_check_branch
        %331 = sbr.rel (%p329) target = $region36
      $region35: #{res_conv3d_block.3} parent=31 // pred_region
        %s332 = smul.u32 16, %s19
      $region36: #{res_conv3d_block.3} parent=31 // pred_fallthru
        _
    $region32: #{res_conv3d_block.3} parent=5 // pred_fallthru
      _
    %p333 = scmp.le.s32.totalorder 2, %s9
    // Predicated region
    $region37: #{res_conv3d_block.3} parent=5 // pred_check
      %p334 = pneg %p333
    $region38: #{res_conv3d_block.3} parent=5 // pred_check_branch
      %336 = sbr.rel (%p334) target = $region40
    $region39: #{res_conv3d_block.3} parent=5 // pred_region
      %s337 = ssub.s32 %s9, 2
      // Predicated region
      $region41: #{res_conv3d_block.3} parent=39 // pred_check
        %p338 = pneg %p132
      $region42: #{res_conv3d_block.3} parent=39 // pred_check_branch
        %340 = sbr.rel (%p338) target = $region44
      $region43: #{res_conv3d_block.3} parent=39 // pred_region
        %s341 = smul.u32 16, %s21
        %p342 = scmp.lt.s32.totalorder %s20, 1
        %s343 = scalar_select %p342, %s20, 1
        %p344 = scmp.lt.s32.totalorder %s341, 15
        %s345 = scalar_select %p344, %s341, 15
        %s346 = smul.addr %s343, 16
        %s347 = sadd.s32 %s345, %s346
        %s348 = smul.addr %s347, 8
        %s349 = scalar_lea.vmem %s3, %s348
      $region44: #{res_conv3d_block.3} parent=39 // pred_fallthru
        _
    $region40: #{res_conv3d_block.3} parent=5 // pred_fallthru
      _
  $region6: #{res_conv3d_block.3} parent=0 // loop_footer
    %s13 = sadd.s32 1, %s9
  $region7: #{res_conv3d_block.3} parent=0 // loop_footer_branch
    %8 = sbr.rel target = $region3
  $region8: #{res_conv3d_block.3} parent=0 // loop_exit
    _

</llo_original>
